<compile_context>
chip_gen: v6e
topology: v6e:2x2x1
jax: 0.10.0
libtpu: 0.0.40
codegen_flags: <defaults>
</compile_context>

<pallas_src>
import jax
import jax.numpy as jnp
from jax.experimental import pallas as pl
from jax.experimental.pallas import tpu as pltpu

_EPS = 1e-5


def _round_up(v, m):
    return ((v + m - 1) // m) * m


def _layernorm_rows(x, gamma, beta):
    """LayerNorm over the last dim of a (rows, D) f32 tile. gamma/beta: (1, D) f32."""
    mean = jnp.mean(x, axis=-1, keepdims=True)
    xc = x - mean
    var = jnp.mean(xc * xc, axis=-1, keepdims=True)        # biased, like PyTorch
    inv = jax.lax.rsqrt(var + _EPS)
    # Fold gamma into the per-row inverse-std scale (one broadcast of (1, D)).
    return xc * (inv * gamma) + beta


# --------------------- fused PreNorm2 + dual-Linear kernel --------------------
def _prenorm2_dual_linear_kernel(x_ref, x2_ref, g_ref, b_ref, w_ref, bias_ref,
                                 o_ref):
    g = g_ref[...].astype(jnp.float32)
    b = b_ref[...].astype(jnp.float32)

    y1 = _layernorm_rows(x_ref[...].astype(jnp.float32), g, b)
    y2 = _layernorm_rows(x2_ref[...].astype(jnp.float32), g, b)

    # One K = 2D matmul instead of two K = D matmuls: concat along lanes and
    # multiply by the pre-stacked (2D, D_out) weight.  f32 accumulation.
    yk = jnp.concatenate([y1, y2], axis=-1).astype(w_ref.dtype)
    acc = jnp.dot(yk, w_ref[...], preferred_element_type=jnp.float32)
    acc = acc + bias_ref[...].astype(jnp.float32)
    o_ref[...] = acc.astype(o_ref.dtype)


def prenorm2_dual_linear(x, x2, gamma, beta, w1, w2, bias, *, row_tile=512,
                         out_dtype=None, matmul_dtype=jnp.bfloat16):
    """PreNorm2 with fn(a, b) = a @ w1 + b @ w2 + bias, fully fused in one kernel.

    x, x2: (..., D); gamma/beta: (D,); w1/w2: (D, D_out); bias: (D_out,).
    NOTE: the matmul runs in `matmul_dtype` on the MXU (default bf16, f32
    accumulation) -- pass jnp.float32 for exact PyTorch f32 Linear semantics.
    Pass out_dtype=jnp.bfloat16 to halve the output HBM traffic when the
    consumer tolerates it.
    """
    assert x.shape == x2.shape, "PreNorm2 applies the same norm to both inputs"
    *lead, d = x.shape
    assert w1.shape[0] == d and w2.shape == w1.shape
    d_out = w1.shape[1]
    out_dtype = out_dtype or x.dtype

    n = 1
    for s in lead:
        n *= s
    x2d = x.reshape(n, d)
    x22d = x2.reshape(n, d)

    # Row tile: multiple of 8 sublanes; ragged tail handled by Pallas masking
    # (no wrapper-side jnp.pad -> no extra HBM pass over the inputs).
    tm = min(row_tile, _round_up(n, 8))
    grid = (pl.cdiv(n, tm),)

    g = gamma.reshape(1, d).astype(jnp.float32)
    b = beta.reshape(1, d).astype(jnp.float32)
    # Pre-stack [w1; w2] once -> single (2D, D_out) resident weight block.
    w = jnp.concatenate([w1, w2], axis=0).astype(matmul_dtype)
    bias2 = bias.reshape(1, d_out).astype(jnp.float32)

    in_itemsize = jnp.dtype(x.dtype).itemsize
    out_itemsize = jnp.dtype(out_dtype).itemsize
    w_itemsize = jnp.dtype(matmul_dtype).itemsize
    cost = pl.CostEstimate(
        flops=4 * n * d * d_out,                           # one K=2D matmul
        transcendentals=2 * n,                             # one rsqrt per row per input
        bytes_accessed=(2 * n * d * in_itemsize            # x, x2
                        + 2 * d * d_out * w_itemsize       # stacked weight (resident)
                        + (2 * d + d_out) * 4              # gamma, beta, bias
                        + n * d_out * out_itemsize),       # output
    )

    # TODO(synk): on v7x with large D/D_out, single-buffer the resident weight
    # block (pipeline_mode=pl.Buffered(1)) and add a second grid axis tiling
    # d_out to stay inside the 64 MiB physical VMEM.

    out = pl.pallas_call(
        _prenorm2_dual_linear_kernel,
        out_shape=jax.ShapeDtypeStruct((n, d_out), out_dtype),
        grid_spec=pltpu.PrefetchScalarGridSpec(
            num_scalar_prefetch=0,
            grid=grid,
            in_specs=[
                pl.BlockSpec((tm, d), lambda i: (i, 0)),          # x tile
                pl.BlockSpec((tm, d), lambda i: (i, 0)),          # x2 tile
                pl.BlockSpec((1, d), lambda i: (0, 0)),           # gamma (resident)
                pl.BlockSpec((1, d), lambda i: (0, 0)),           # beta  (resident)
                pl.BlockSpec((2 * d, d_out), lambda i: (0, 0)),   # [w1;w2] (resident)
                pl.BlockSpec((1, d_out), lambda i: (0, 0)),       # bias  (resident)
            ],
            out_specs=pl.BlockSpec((tm, d_out), lambda i: (i, 0)),
        ),
        compiler_params=pltpu.CompilerParams(
            dimension_semantics=("parallel",),
            # Portable across v5e/v6e (128 MiB) and v7x (64 MiB physical).
            vmem_limit_bytes=32 * 1024 * 1024,
        ),
        cost_estimate=cost,
    )(x2d, x22d, g, b, w, bias2)

    return out.reshape(*lead, d_out)


# ------------- two-in / two-out LayerNorm kernel (for arbitrary fn) ----------
def _dual_layernorm_kernel(x_ref, x2_ref, g_ref, b_ref, o1_ref, o2_ref):
    g = g_ref[...].astype(jnp.float32)
    b = b_ref[...].astype(jnp.float32)
    o1_ref[...] = _layernorm_rows(x_ref[...].astype(jnp.float32), g, b
                                  ).astype(o1_ref.dtype)
    o2_ref[...] = _layernorm_rows(x2_ref[...].astype(jnp.float32), g, b
                                  ).astype(o2_ref.dtype)


def dual_layernorm_pallas(x2d, x22d, gamma, beta, *, row_tile=512):
    """Normalize two (N, D) arrays with shared gamma/beta in ONE launch.

    No concatenate / pad copies; ragged N handled by Pallas tail masking.
    """
    n, d = x2d.shape
    assert x22d.shape == (n, d)
    tm = min(row_tile, _round_up(n, 8))
    grid = (pl.cdiv(n, tm),)
    g = gamma.reshape(1, d).astype(jnp.float32)
    b = beta.reshape(1, d).astype(jnp.float32)
    out1, out2 = pl.pallas_call(
        _dual_layernorm_kernel,
        out_shape=(jax.ShapeDtypeStruct((n, d), x2d.dtype),
                   jax.ShapeDtypeStruct((n, d), x22d.dtype)),
        grid_spec=pltpu.PrefetchScalarGridSpec(
            num_scalar_prefetch=0,
            grid=grid,
            in_specs=[
                pl.BlockSpec((tm, d), lambda i: (i, 0)),
                pl.BlockSpec((tm, d), lambda i: (i, 0)),
                pl.BlockSpec((1, d), lambda i: (0, 0)),
                pl.BlockSpec((1, d), lambda i: (0, 0)),
            ],
            out_specs=(pl.BlockSpec((tm, d), lambda i: (i, 0)),
                       pl.BlockSpec((tm, d), lambda i: (i, 0))),
        ),
        compiler_params=pltpu.CompilerParams(
            dimension_semantics=("parallel",),
            vmem_limit_bytes=32 * 1024 * 1024,
        ),
    )(x2d, x22d, g, b)
    return out1, out2


def prenorm2(x, x2, gamma, beta, fn, **kwargs):
    """Generic PreNorm2.forward: fn(LayerNorm(x), LayerNorm(x2), **kwargs).

    Both inputs are normalized in a single two-in/two-out kernel launch.
    """
    # TODO(synk): an arbitrary `fn` cannot be fused into the Pallas kernel
    # generically; use prenorm2_dual_linear for the fused dual-Linear case.
    d = x.shape[-1]
    assert x2.shape[-1] == d
    nx_flat, nx2_flat = dual_layernorm_pallas(
        x.reshape(-1, d), x2.reshape(-1, d), gamma, beta)
    return fn(nx_flat.reshape(x.shape), nx2_flat.reshape(x2.shape), **kwargs)


if __name__ == "__main__":
    # Small, lane-dense shapes: D multiple of 128; N = 1200 rows is ragged
    # against tm=512 (exercises the masked tail path) and gives 3 grid steps.
    B, S, D, D_OUT = 4, 300, 128, 128

    key = jax.random.PRNGKey(0)
    kx, kx2, kg, kb, kw1, kw2, kbias = jax.random.split(key, 7)

    x = jax.random.normal(kx, (B, S, D), dtype=jnp.float32)
    x2 = jax.random.normal(kx2, (B, S, D), dtype=jnp.float32)
    gamma = 1.0 + 0.1 * jax.random.normal(kg, (D,), dtype=jnp.float32)
    beta = 0.1 * jax.random.normal(kb, (D,), dtype=jnp.float32)
    w1 = jax.random.normal(kw1, (D, D_OUT), dtype=jnp.float32) / jnp.sqrt(D)
    w2 = jax.random.normal(kw2, (D, D_OUT), dtype=jnp.float32) / jnp.sqrt(D)
    bias = 0.1 * jax.random.normal(kbias, (D_OUT,), dtype=jnp.float32)

    # Plain-JAX LayerNorm reference (PyTorch semantics).
    def ln_ref(t):
        mean = jnp.mean(t, axis=-1, keepdims=True)
        var = jnp.mean((t - mean) ** 2, axis=-1, keepdims=True)
        return (t - mean) / jnp.sqrt(var + _EPS) * gamma + beta

    # ---- fused path: fn(a, b) = a @ w1 + b @ w2 + bias -----------------------
    out_fused = prenorm2_dual_linear(x, x2, gamma, beta, w1, w2, bias,
                                     row_tile=512)
    out_fused = jax.block_until_ready(out_fused)

    n1 = ln_ref(x).astype(jnp.bfloat16)
    n2 = ln_ref(x2).astype(jnp.bfloat16)
    ref_fused = (
        jnp.einsum("bsd,de->bse", n1, w1.astype(jnp.bfloat16),
                   preferred_element_type=jnp.float32)
        + jnp.einsum("bsd,de->bse", n2, w2.astype(jnp.bfloat16),
                     preferred_element_type=jnp.float32)
        + bias
    )
    assert out_fused.shape == (B, S, D_OUT)
    assert bool(jnp.all(jnp.isfinite(out_fused))), "fused PreNorm2 produced non-finite values"
    assert jnp.allclose(out_fused, ref_fused, atol=2e-2, rtol=2e-2), \
        "fused PreNorm2 mismatch vs reference"

    # ---- generic path: dual-LN kernel + arbitrary (non-fused) fn -------------
    fn = lambda a, b: a @ w1 + b @ w2 + bias
    out_gen = prenorm2(x, x2, gamma, beta, fn)
    out_gen = jax.block_until_ready(out_gen)
    ref_gen = ln_ref(x) @ w1 + ln_ref(x2) @ w2 + bias
    assert bool(jnp.all(jnp.isfinite(out_gen))), "generic PreNorm2 produced non-finite values"
    assert jnp.allclose(out_gen, ref_gen, atol=2e-2, rtol=2e-2), \
        "generic PreNorm2 mismatch vs reference"

    print("KERNEL_OK")
</pallas_src>

<mosaic_0001>
module attributes {stable_mosaic.version = 11 : i64} {
  func.func @_prenorm2_dual_linear_kernel(%arg0: i32, %arg1: memref<512x128xf32, #tpu.memory_space<vmem>>, %arg2: memref<512x128xf32, #tpu.memory_space<vmem>>, %arg3: memref<1x128xf32, #tpu.memory_space<vmem>>, %arg4: memref<1x128xf32, #tpu.memory_space<vmem>>, %arg5: memref<256x128xbf16, #tpu.memory_space<vmem>>, %arg6: memref<1x128xf32, #tpu.memory_space<vmem>>, %arg7: memref<512x128xf32, #tpu.memory_space<vmem>>) attributes {dimension_semantics = [#tpu.dimension_semantics<parallel>], iteration_bounds = array<i64: 3>, scalar_prefetch = 0 : i64, scratch_operands = 0 : i64, tpu.core_type = #tpu.core_type<tc>, window_params = [{transform_indices = @transform_0, window_bounds = array<i64: 512, 128>}, {transform_indices = @transform_1, window_bounds = array<i64: 512, 128>}, {pipeline_mode = #tpu.pipeline_mode<synchronous>, transform_indices = @transform_2, window_bounds = array<i64: 1, 128>}, {pipeline_mode = #tpu.pipeline_mode<synchronous>, transform_indices = @transform_3, window_bounds = array<i64: 1, 128>}, {pipeline_mode = #tpu.pipeline_mode<synchronous>, transform_indices = @transform_4, window_bounds = array<i64: 256, 128>}, {pipeline_mode = #tpu.pipeline_mode<synchronous>, transform_indices = @transform_5, window_bounds = array<i64: 1, 128>}, {transform_indices = @transform_6, window_bounds = array<i64: 512, 128>}]} {
    %c0 = arith.constant 0 : index
    %c0_0 = arith.constant 0 : index
    %0 = vector.load %arg3[%c0, %c0_0] : memref<1x128xf32, #tpu.memory_space<vmem>>, vector<1x128xf32>
    %c0_1 = arith.constant 0 : index
    %c0_2 = arith.constant 0 : index
    %1 = vector.load %arg4[%c0_1, %c0_2] : memref<1x128xf32, #tpu.memory_space<vmem>>, vector<1x128xf32>
    %c0_3 = arith.constant 0 : index
    %c0_4 = arith.constant 0 : index
    %2 = vector.load %arg1[%c0_3, %c0_4] : memref<512x128xf32, #tpu.memory_space<vmem>>, vector<512x128xf32>
    %cst = arith.constant dense<0.000000e+00> : vector<512xf32>
    %3 = vector.multi_reduction <add>, %2, %cst [1] : vector<512x128xf32> to vector<512xf32>
    %4 = vector.shape_cast %3 : vector<512xf32> to vector<512x1xf32>
    %cst_5 = arith.constant 1.280000e+02 : f32
    %5 = vector.broadcast %cst_5 : f32 to vector<512x1xf32>
    %6 = arith.divf %4, %5 : vector<512x1xf32>
    %7 = vector.broadcast %6 : vector<512x1xf32> to vector<512x128xf32>
    %8 = arith.subf %2, %7 : vector<512x128xf32>
    %9 = arith.mulf %8, %8 : vector<512x128xf32>
    %cst_6 = arith.constant dense<0.000000e+00> : vector<512xf32>
    %10 = vector.multi_reduction <add>, %9, %cst_6 [1] : vector<512x128xf32> to vector<512xf32>
    %11 = vector.shape_cast %10 : vector<512xf32> to vector<512x1xf32>
    %cst_7 = arith.constant 1.280000e+02 : f32
    %12 = vector.broadcast %cst_7 : f32 to vector<512x1xf32>
    %13 = arith.divf %11, %12 : vector<512x1xf32>
    %cst_8 = arith.constant 9.99999974E-6 : f32
    %14 = vector.broadcast %cst_8 : f32 to vector<512x1xf32>
    %15 = arith.addf %13, %14 : vector<512x1xf32>
    %16 = math.rsqrt %15 : vector<512x1xf32>
    %17 = vector.broadcast %16 : vector<512x1xf32> to vector<512x128xf32>
    %18 = vector.broadcast %0 : vector<1x128xf32> to vector<512x128xf32>
    %19 = arith.mulf %17, %18 : vector<512x128xf32>
    %20 = arith.mulf %8, %19 : vector<512x128xf32>
    %21 = vector.broadcast %1 : vector<1x128xf32> to vector<512x128xf32>
    %22 = arith.addf %20, %21 : vector<512x128xf32>
    %c0_9 = arith.constant 0 : index
    %c0_10 = arith.constant 0 : index
    %23 = vector.load %arg2[%c0_9, %c0_10] : memref<512x128xf32, #tpu.memory_space<vmem>>, vector<512x128xf32>
    %cst_11 = arith.constant dense<0.000000e+00> : vector<512xf32>
    %24 = vector.multi_reduction <add>, %23, %cst_11 [1] : vector<512x128xf32> to vector<512xf32>
    %25 = vector.shape_cast %24 : vector<512xf32> to vector<512x1xf32>
    %cst_12 = arith.constant 1.280000e+02 : f32
    %26 = vector.broadcast %cst_12 : f32 to vector<512x1xf32>
    %27 = arith.divf %25, %26 : vector<512x1xf32>
    %28 = vector.broadcast %27 : vector<512x1xf32> to vector<512x128xf32>
    %29 = arith.subf %23, %28 : vector<512x128xf32>
    %30 = arith.mulf %29, %29 : vector<512x128xf32>
    %cst_13 = arith.constant dense<0.000000e+00> : vector<512xf32>
    %31 = vector.multi_reduction <add>, %30, %cst_13 [1] : vector<512x128xf32> to vector<512xf32>
    %32 = vector.shape_cast %31 : vector<512xf32> to vector<512x1xf32>
    %cst_14 = arith.constant 1.280000e+02 : f32
    %33 = vector.broadcast %cst_14 : f32 to vector<512x1xf32>
    %34 = arith.divf %32, %33 : vector<512x1xf32>
    %cst_15 = arith.constant 9.99999974E-6 : f32
    %35 = vector.broadcast %cst_15 : f32 to vector<512x1xf32>
    %36 = arith.addf %34, %35 : vector<512x1xf32>
    %37 = math.rsqrt %36 : vector<512x1xf32>
    %38 = vector.broadcast %37 : vector<512x1xf32> to vector<512x128xf32>
    %39 = vector.broadcast %0 : vector<1x128xf32> to vector<512x128xf32>
    %40 = arith.mulf %38, %39 : vector<512x128xf32>
    %41 = arith.mulf %29, %40 : vector<512x128xf32>
    %42 = vector.broadcast %1 : vector<1x128xf32> to vector<512x128xf32>
    %43 = arith.addf %41, %42 : vector<512x128xf32>
    %44 = tpu.concatenate %22, %43 in 1 : vector<512x128xf32>, vector<512x128xf32> -> vector<512x256xf32>
    %45 = arith.truncf %44 : vector<512x256xf32> to vector<512x256xbf16>
    %c0_16 = arith.constant 0 : index
    %c0_17 = arith.constant 0 : index
    %46 = vector.load %arg5[%c0_16, %c0_17] : memref<256x128xbf16, #tpu.memory_space<vmem>>, vector<256x128xbf16>
    %cst_18 = arith.constant dense<0.000000e+00> : vector<512x128xf32>
    %47 = tpu.matmul %45, %46, %cst_18 {dimension_numbers = #tpu.dot_dimension_numbers<[1], [0], [0], [1], [0, 0, 1, 1], [], []>} : vector<512x256xbf16>, vector<256x128xbf16>, vector<512x128xf32> -> vector<512x128xf32>
    %c0_19 = arith.constant 0 : index
    %c0_20 = arith.constant 0 : index
    %48 = vector.load %arg6[%c0_19, %c0_20] : memref<1x128xf32, #tpu.memory_space<vmem>>, vector<1x128xf32>
    %49 = vector.broadcast %48 : vector<1x128xf32> to vector<512x128xf32>
    %50 = arith.addf %47, %49 : vector<512x128xf32>
    %c0_21 = arith.constant 0 : index
    %c0_22 = arith.constant 0 : index
    %51 = vector.load %arg7[%c0_21, %c0_22] : memref<512x128xf32, #tpu.memory_space<vmem>>, vector<512x128xf32>
    tpu.vector_store %arg7[%c0_21, %c0_22], %50 {strides = array<i32>} : memref<512x128xf32, #tpu.memory_space<vmem>>, vector<512x128xf32>,
    return
  }
  func.func @transform_0(%arg0: i32) -> (i32, i32) {
    %c0_i32 = arith.constant 0 : i32
    %c0_i32_0 = arith.constant 0 : i32
    return %arg0, %c0_i32 : i32, i32
  }
  func.func @transform_1(%arg0: i32) -> (i32, i32) {
    %c0_i32 = arith.constant 0 : i32
    %c0_i32_0 = arith.constant 0 : i32
    return %arg0, %c0_i32 : i32, i32
  }
  func.func @transform_2(%arg0: i32) -> (i32, i32) {
    %c0_i32 = arith.constant 0 : i32
    %c0_i32_0 = arith.constant 0 : i32
    %c0_i32_1 = arith.constant 0 : i32
    return %c0_i32, %c0_i32_0 : i32, i32
  }
  func.func @transform_3(%arg0: i32) -> (i32, i32) {
    %c0_i32 = arith.constant 0 : i32
    %c0_i32_0 = arith.constant 0 : i32
    %c0_i32_1 = arith.constant 0 : i32
    return %c0_i32, %c0_i32_0 : i32, i32
  }
  func.func @transform_4(%arg0: i32) -> (i32, i32) {
    %c0_i32 = arith.constant 0 : i32
    %c0_i32_0 = arith.constant 0 : i32
    %c0_i32_1 = arith.constant 0 : i32
    return %c0_i32, %c0_i32_0 : i32, i32
  }
  func.func @transform_5(%arg0: i32) -> (i32, i32) {
    %c0_i32 = arith.constant 0 : i32
    %c0_i32_0 = arith.constant 0 : i32
    %c0_i32_1 = arith.constant 0 : i32
    return %c0_i32, %c0_i32_0 : i32, i32
  }
  func.func @transform_6(%arg0: i32) -> (i32, i32) {
    %c0_i32 = arith.constant 0 : i32
    %c0_i32_0 = arith.constant 0 : i32
    return %arg0, %c0_i32 : i32, i32
  }
}

</mosaic_0001>

<llo_original>
// kernel: tpu_custom_call.1
$region0: #{tpu_custom_call.1}
  #allocation0 [shape = 'u32[]', space=smem, size = 0x4, offset = 0x4, fixed_abs, tag = 'smem constant byte address 0x4 - core index']
  #allocation1 [shape = 'u32[144,128]{1,0:T(1,128)}', space=vmem, size = 0x12000, scoped, tag = 'internal scratch']
  %s0 = inlined_call_operand.hbm [shape: f32[1200,128], index: 0, kind: input, shape index: {}]
  %s1 = inlined_call_operand.hbm [shape: f32[1200,128], index: 1, kind: input, shape index: {}]
  %s2 = inlined_call_operand.vmem [shape: f32[1,128], index: 2, kind: input, shape index: {}]
  %s3 = inlined_call_operand.vmem [shape: f32[1,128], index: 3, kind: input, shape index: {}]
  %s4 = inlined_call_operand.hbm [shape: bf16[256,128], index: 4, kind: input, shape index: {}]
  %s5 = inlined_call_operand.vmem [shape: f32[1,128], index: 5, kind: input, shape index: {}]
  %s6 = inlined_call_operand.hbm [shape: f32[1200,128], index: 6, kind: output, shape index: {}]
  %s7 = sld [smem:[#allocation0]]
  $region69: #{tpu_custom_call.1} parent=0
    _
  %s9 = ssub.s32 1, %s7
  %s10 = scalar_select 0, %s9, %s7
  $region1: #{tpu_custom_call.1} parent=0
    #allocation2 [shape = 'u8[524288]{0}', space=vmem, size = 0x80000, scoped, tag = 'input window, operand 0']
    #allocation3 [shape = 's32[2]{0}', space=sflag, size = 0x8, scoped, tag = 'scoped memory for tpu_custom_call.1']
    #allocation4 [shape = 's32[2]{0}', space=sflag, size = 0x8, scoped, tag = 'scoped memory for tpu_custom_call.1']
    #allocation5 [shape = 'u8[524288]{0}', space=vmem, size = 0x80000, scoped, tag = 'input window, operand 1']
    #allocation6 [shape = 's32[2]{0}', space=sflag, size = 0x8, scoped, tag = 'scoped memory for tpu_custom_call.1']
    #allocation7 [shape = 'u8[65536]{0}', space=vmem, size = 0x10000, scoped, tag = 'input window, operand 4, single buffered']
    #allocation8 [shape = 'u8[524288]{0}', space=vmem, size = 0x80000, scoped, tag = 'output window, operand 0']
    %11 = vsyncpa [#allocation3], 0
    %s12 = scalar_lea.sflag [#allocation3], 1
    %13 = vsyncpa %s12, 0
    %14 = vsyncpa [#allocation6], 0
    %s15 = scalar_lea.sflag [#allocation6], 1
    %16 = vsyncpa %s15, 0
    %17 = vsyncpa [#allocation4], 0
    %s18 = scalar_lea.sflag [#allocation4], 1
    %19 = vsyncpa %s18, 0
    loop: start=0, step=1, limit=5
    $region2: #{tpu_custom_call.1} parent=1 // loop_pre_header
      _
    $region3: #{tpu_custom_call.1} parent=1 // loop_header
      %s21 = sphi 0, %s25
      %p22 = scmp.ge.s32.totalorder %s21, 5
      %s31 = sphi 0, %s33
      %s34 = sphi 0, %s31
      %s35 = sphi 0, %s34
      %s51 = sphi 0, %s35
      %s57 = sphi 0, %s59
      %s60 = sphi 0, %s57
      %s61 = sphi 0, %s60
      %s77 = sphi 0, %s61
      %s81 = sphi 0, %s81
      %s83 = sphi 0, %s81
      %s84 = sphi 0, %s83
      %s98 = sphi 0, %s84
      %s102 = sphi 0, %s102
      %s104 = sphi 0, %s102
      %s105 = sphi 0, %s104
      %s119 = sphi 0, %s105
      %s123 = sphi 0, %s123
      %s125 = sphi 0, %s123
      %s126 = sphi 0, %s125
      %s140 = sphi 0, %s126
      %s144 = sphi 0, %s144
      %s146 = sphi 0, %s144
      %s147 = sphi 0, %s146
      %s161 = sphi 0, %s147
      %s167 = sphi 0, %s169
      %s170 = sphi 0, %s167
      %s171 = sphi 0, %s170
      %s187 = sphi 0, %s171
    $region4: #{tpu_custom_call.1} parent=1 // loop_header_branch
      %24 = sbr.rel (%p22) target = $region8
    $region5: #{tpu_custom_call.1} parent=1 // loop_body
      %s26 = ssub.s32 %s21, 1
      %s27 = ssub.s32 %s21, 2
      %s28 = sadd.s32 %s21, 1
      %s29 = ssub.s32 %s21, %s28
      %p30 = scmp.eq.s32.totalorder %s29, 0
      %s32 = sadd.s32 %s31, 1
      %s33 = scalar_select %p30, %s31, %s32
      %p36 = pneg %p30
      %p37 = scmp.eq.s32.totalorder %s21, 2
      %p38 = por %p36, %p37
      %p39 = scmp.ne.s32.totalorder %s31, %s34
      %p40 = scmp.eq.s32.totalorder %s21, 0
      %p41 = por %p39, %p40
      %p42 = scmp.ne.s32.totalorder %s31, %s34
      %p43 = scmp.eq.s32.totalorder %s26, 2
      %p44 = por %p42, %p43
      %p45 = scmp.ne.s32.totalorder %s34, %s35
      %p46 = scmp.eq.s32.totalorder %s26, 0
      %p47 = por %p45, %p46
      %p48 = scmp.ne.s32.totalorder %s34, %s35
      %p49 = scmp.eq.s32.totalorder %s27, 2
      %p50 = por %p48, %p49
      %p52 = scmp.ne.s32.totalorder %s35, %s51
      %p53 = scmp.eq.s32.totalorder %s27, 0
      %p54 = por %p52, %p53
      %s55 = ssub.s32 %s21, %s28
      %p56 = scmp.eq.s32.totalorder %s55, 0
      %s58 = sadd.s32 %s57, 1
      %s59 = scalar_select %p56, %s57, %s58
      %p62 = pneg %p56
      %p63 = scmp.eq.s32.totalorder %s21, 2
      %p64 = por %p62, %p63
      %p65 = scmp.ne.s32.totalorder %s57, %s60
      %p66 = scmp.eq.s32.totalorder %s21, 0
      %p67 = por %p65, %p66
      %p68 = scmp.ne.s32.totalorder %s57, %s60
      %p69 = scmp.eq.s32.totalorder %s26, 2
      %p70 = por %p68, %p69
      %p71 = scmp.ne.s32.totalorder %s60, %s61
      %p72 = scmp.eq.s32.totalorder %s26, 0
      %p73 = por %p71, %p72
      %p74 = scmp.ne.s32.totalorder %s60, %s61
      %p75 = scmp.eq.s32.totalorder %s27, 2
      %p76 = por %p74, %p75
      %p78 = scmp.ne.s32.totalorder %s61, %s77
      %p79 = scmp.eq.s32.totalorder %s27, 0
      %p80 = por %p78, %p79
      %s82 = sadd.s32 %s81, 1
      %p85 = scmp.eq.s32.totalorder %s21, 2
      %p86 = scmp.ne.s32.totalorder %s81, %s83
      %p87 = scmp.eq.s32.totalorder %s21, 0
      %p88 = por %p86, %p87
      %p89 = scmp.ne.s32.totalorder %s81, %s83
      %p90 = scmp.eq.s32.totalorder %s26, 2
      %p91 = por %p89, %p90
      %p92 = scmp.ne.s32.totalorder %s83, %s84
      %p93 = scmp.eq.s32.totalorder %s26, 0
      %p94 = por %p92, %p93
      %p95 = scmp.ne.s32.totalorder %s83, %s84
      %p96 = scmp.eq.s32.totalorder %s27, 2
      %p97 = por %p95, %p96
      %p99 = scmp.ne.s32.totalorder %s84, %s98
      %p100 = scmp.eq.s32.totalorder %s27, 0
      %p101 = por %p99, %p100
      %s103 = sadd.s32 %s102, 1
      %p106 = scmp.eq.s32.totalorder %s21, 2
      %p107 = scmp.ne.s32.totalorder %s102, %s104
      %p108 = scmp.eq.s32.totalorder %s21, 0
      %p109 = por %p107, %p108
      %p110 = scmp.ne.s32.totalorder %s102, %s104
      %p111 = scmp.eq.s32.totalorder %s26, 2
      %p112 = por %p110, %p111
      %p113 = scmp.ne.s32.totalorder %s104, %s105
      %p114 = scmp.eq.s32.totalorder %s26, 0
      %p115 = por %p113, %p114
      %p116 = scmp.ne.s32.totalorder %s104, %s105
      %p117 = scmp.eq.s32.totalorder %s27, 2
      %p118 = por %p116, %p117
      %p120 = scmp.ne.s32.totalorder %s105, %s119
      %p121 = scmp.eq.s32.totalorder %s27, 0
      %p122 = por %p120, %p121
      %s124 = sadd.s32 %s123, 1
      %p127 = scmp.eq.s32.totalorder %s21, 2
      %p128 = scmp.ne.s32.totalorder %s123, %s125
      %p129 = scmp.eq.s32.totalorder %s21, 0
      %p130 = por %p128, %p129
      %p131 = scmp.ne.s32.totalorder %s123, %s125
      %p132 = scmp.eq.s32.totalorder %s26, 2
      %p133 = por %p131, %p132
      %p134 = scmp.ne.s32.totalorder %s125, %s126
      %p135 = scmp.eq.s32.totalorder %s26, 0
      %p136 = por %p134, %p135
      %p137 = scmp.ne.s32.totalorder %s125, %s126
      %p138 = scmp.eq.s32.totalorder %s27, 2
      %p139 = por %p137, %p138
      %p141 = scmp.ne.s32.totalorder %s126, %s140
      %p142 = scmp.eq.s32.totalorder %s27, 0
      %p143 = por %p141, %p142
      %s145 = sadd.s32 %s144, 1
      %p148 = scmp.eq.s32.totalorder %s21, 2
      %p149 = scmp.ne.s32.totalorder %s144, %s146
      %p150 = scmp.eq.s32.totalorder %s21, 0
      %p151 = por %p149, %p150
      %p152 = scmp.ne.s32.totalorder %s144, %s146
      %p153 = scmp.eq.s32.totalorder %s26, 2
      %p154 = por %p152, %p153
      %p155 = scmp.ne.s32.totalorder %s146, %s147
      %p156 = scmp.eq.s32.totalorder %s26, 0
      %p157 = por %p155, %p156
      %p158 = scmp.ne.s32.totalorder %s146, %s147
      %p159 = scmp.eq.s32.totalorder %s27, 2
      %p160 = por %p158, %p159
      %p162 = scmp.ne.s32.totalorder %s147, %s161
      %p163 = scmp.eq.s32.totalorder %s27, 0
      %p164 = por %p162, %p163
      %s165 = ssub.s32 %s21, %s28
      %p166 = scmp.eq.s32.totalorder %s165, 0
      %s168 = sadd.s32 %s167, 1
      %s169 = scalar_select %p166, %s167, %s168
      %p172 = pneg %p166
      %p173 = scmp.eq.s32.totalorder %s21, 2
      %p174 = por %p172, %p173
      %p175 = scmp.ne.s32.totalorder %s167, %s170
      %p176 = scmp.eq.s32.totalorder %s21, 0
      %p177 = por %p175, %p176
      %p178 = scmp.ne.s32.totalorder %s167, %s170
      %p179 = scmp.eq.s32.totalorder %s26, 2
      %p180 = por %p178, %p179
      %p181 = scmp.ne.s32.totalorder %s170, %s171
      %p182 = scmp.eq.s32.totalorder %s26, 0
      %p183 = por %p181, %p182
      %p184 = scmp.ne.s32.totalorder %s170, %s171
      %p185 = scmp.eq.s32.totalorder %s27, 2
      %p186 = por %p184, %p185
      %p188 = scmp.ne.s32.totalorder %s171, %s187
      %p189 = scmp.eq.s32.totalorder %s27, 0
      %p190 = por %p188, %p189
      %p191 = scmp.le.s32.totalorder 1, %s21
      %p192 = scmp.lt.s32.totalorder %s21, 4
      %p193 = pnand %p191, %p192
      %p194 = pneg %p193
      // Predicated region
      $region9: #{tpu_custom_call.1} parent=5 // pred_check
        _
      $region10: #{tpu_custom_call.1} parent=5 // pred_check_branch
        %196 = sbr.rel (%p193) target = $region12
      $region11: #{tpu_custom_call.1} parent=5 // pred_region
        %s197 = ssub.s32 %s21, 1
        // Predicated region
        $region13: #{tpu_custom_call.1} parent=11 // pred_check
          %p198 = pneg %p94
        $region14: #{tpu_custom_call.1} parent=11 // pred_check_branch
          %200 = sbr.rel (%p198) target = $region16
        $region15: #{tpu_custom_call.1} parent=11 // pred_region
          _
        $region16: #{tpu_custom_call.1} parent=11 // pred_fallthru
          _
        // Predicated region
        $region17: #{tpu_custom_call.1} parent=11 // pred_check
          %p201 = pneg %p115
        $region18: #{tpu_custom_call.1} parent=11 // pred_check_branch
          %203 = sbr.rel (%p201) target = $region20
        $region19: #{tpu_custom_call.1} parent=11 // pred_region
          _
        $region20: #{tpu_custom_call.1} parent=11 // pred_fallthru
          _
        // Predicated region
        $region21: #{tpu_custom_call.1} parent=11 // pred_check
          %p204 = pneg %p136
        $region22: #{tpu_custom_call.1} parent=11 // pred_check_branch
          %206 = sbr.rel (%p204) target = $region24
        $region23: #{tpu_custom_call.1} parent=11 // pred_region
          %s208 = ssub.s32 2048, 2048
          %209 = vsyncadd [#allocation6], %s208
          %s210 = sshll.u32 [#allocation7], 4
          %s211 = int_to_ptr.vmem [resolvable:$true] %s210
          %216 = dma.hbm_to_vmem [thread:$0]  %s4, 2048, %s211, [#allocation6], 64, 64, 4
        $region24: #{tpu_custom_call.1} parent=11 // pred_fallthru
          _
        // Predicated region
        $region25: #{tpu_custom_call.1} parent=11 // pred_check
          %p217 = pneg %p157
        $region26: #{tpu_custom_call.1} parent=11 // pred_check_branch
          %219 = sbr.rel (%p217) target = $region28
        $region27: #{tpu_custom_call.1} parent=11 // pred_region
          _
        $region28: #{tpu_custom_call.1} parent=11 // pred_fallthru
          _
      $region12: #{tpu_custom_call.1} parent=5 // pred_fallthru
        _
      %p220 = scmp.lt.s32.totalorder %s21, 3
      // Predicated region
      $region29: #{tpu_custom_call.1} parent=5 // pred_check
        %p221 = pneg %p220
      $region30: #{tpu_custom_call.1} parent=5 // pred_check_branch
        %223 = sbr.rel (%p221) target = $region32
      $region31: #{tpu_custom_call.1} parent=5 // pred_region
        // Predicated region
        $region33: #{tpu_custom_call.1} parent=31 // pred_check
          %p224 = pneg %p41
        $region34: #{tpu_custom_call.1} parent=31 // pred_check_branch
          %226 = sbr.rel (%p224) target = $region36
        $region35: #{tpu_custom_call.1} parent=31 // pred_region
          %s227 = sand.u32 %s31, 1
          %s228 = scalar_lea.sflag [#allocation3], %s227
          %s229 = sand.u32 %s31, 1
          %s230 = smul.addr %s229, 512
          %s231 = scalar_lea.vmem [#allocation2], %s230
          %s232 = smul.u32 64, %s21
          %s233 = ssub.s32 150, %s232
          %p234 = scmp.lt.s32.totalorder %s233, 64
          %s235 = scalar_select %p234, %s233, 64
          %s236 = smul.u32 128, %s235
          %s238 = ssub.s32 8192, %s236
          %239 = vsyncadd %s228, %s238
          %p240 = scmp.ne.s32.totalorder 0, %s236
          %s241 = smul.addr %s232, 128
          %s242 = scalar_lea.hbm %s0, %s241
          %s243 = smul.u32 8, %s235
          %s244 = sshll.u32 %s231, 4
          %s245 = int_to_ptr.vmem [resolvable:$true] %s244
          %s246 = sshll.u32 %s243, 4
          %250 = dma.hbm_to_vmem [thread:$0]  (%p240), %s242, %s246, %s245, %s228, 128, 128, 8
        $region36: #{tpu_custom_call.1} parent=31 // pred_fallthru
          _
        // Predicated region
        $region37: #{tpu_custom_call.1} parent=31 // pred_check
          %p251 = pneg %p67
        $region38: #{tpu_custom_call.1} parent=31 // pred_check_branch
          %253 = sbr.rel (%p251) target = $region40
        $region39: #{tpu_custom_call.1} parent=31 // pred_region
          %s254 = sand.u32 %s21, 1
          %s255 = scalar_lea.sflag [#allocation6], %s254
          %s256 = sand.u32 %s57, 1
          %s257 = smul.addr %s256, 512
          %s258 = scalar_lea.vmem [#allocation5], %s257
          %s259 = smul.u32 64, %s21
          %s260 = ssub.s32 150, %s259
          %p261 = scmp.lt.s32.totalorder %s260, 64
          %s262 = scalar_select %p261, %s260, 64
          %s263 = smul.u32 128, %s262
          %s265 = ssub.s32 8192, %s263
          %266 = vsyncadd %s255, %s265
          %p267 = scmp.ne.s32.totalorder 0, %s263
          %s268 = smul.addr %s259, 128
          %s269 = scalar_lea.hbm %s1, %s268
          %s270 = smul.u32 8, %s262
          %s271 = sshll.u32 %s258, 4
          %s272 = int_to_ptr.vmem [resolvable:$true] %s271
          %s273 = sshll.u32 %s270, 4
          %277 = dma.hbm_to_vmem [thread:$0]  (%p267), %s269, %s273, %s272, %s255, 128, 128, 8
        $region40: #{tpu_custom_call.1} parent=31 // pred_fallthru
          _
      $region32: #{tpu_custom_call.1} parent=5 // pred_fallthru
        _
      %p278 = scmp.le.s32.totalorder 1, %s21
      %p279 = scmp.lt.s32.totalorder %s21, 4
      %p280 = pnand %p278, %p279
      %p281 = pneg %p280
      // Predicated region
      $region41: #{tpu_custom_call.1} parent=5 // pred_check
        _
      $region42: #{tpu_custom_call.1} parent=5 // pred_check_branch
        %283 = sbr.rel (%p280) target = $region44
      $region43: #{tpu_custom_call.1} parent=5 // pred_region
        %s284 = ssub.s32 %s21, 1
        %s285 = sand.u32 %s34, 1
        %s286 = scalar_lea.sflag [#allocation3], %s285
        %s287 = sand.u32 %s34, 1
        %s288 = smul.addr %s287, 512
        %s289 = scalar_lea.vmem [#allocation2], %s288
        // Predicated region
        $region45: #{tpu_custom_call.1} parent=43 // pred_check
          %p290 = pneg %p47
        $region46: #{tpu_custom_call.1} parent=43 // pred_check_branch
          %292 = sbr.rel (%p290) target = $region48
        $region47: #{tpu_custom_call.1} parent=43 // pred_region
          %293 = dma.done %s286, 8192
        $region48: #{tpu_custom_call.1} parent=43 // pred_fallthru
          _
        %s294 = sand.u32 %s26, 1
        %s295 = scalar_lea.sflag [#allocation6], %s294
        %s296 = sand.u32 %s60, 1
        %s297 = smul.addr %s296, 512
        %s298 = scalar_lea.vmem [#allocation5], %s297
        // Predicated region
        $region49: #{tpu_custom_call.1} parent=43 // pred_check
          %p299 = pneg %p73
        $region50: #{tpu_custom_call.1} parent=43 // pred_check_branch
          %301 = sbr.rel (%p299) target = $region52
        $region51: #{tpu_custom_call.1} parent=43 // pred_region
          %302 = dma.done %s295, 8192
        $region52: #{tpu_custom_call.1} parent=43 // pred_fallthru
          _
        // Predicated region
        $region53: #{tpu_custom_call.1} parent=43 // pred_check
          %p303 = pneg %p136
        $region54: #{tpu_custom_call.1} parent=43 // pred_check_branch
          %305 = sbr.rel (%p303) target = $region56
        $region55: #{tpu_custom_call.1} parent=43 // pred_region
          %306 = dma.done [#allocation6], 2048
        $region56: #{tpu_custom_call.1} parent=43 // pred_fallthru
          _
        %s307 = sand.u32 %s34, 1
        %s308 = scalar_lea.sflag [#allocation3], %s307
        %s309 = sand.u32 %s34, 1
        %s310 = smul.addr %s309, 512
        %s311 = scalar_lea.vmem [#allocation2], %s310
        %p312 = pneg %p47
        %p313 = pneg %p44
        %s314 = sand.u32 %s26, 1
        %s315 = scalar_lea.sflag [#allocation6], %s314
        %s316 = sand.u32 %s60, 1
        %s317 = smul.addr %s316, 512
        %s318 = scalar_lea.vmem [#allocation5], %s317
        %p319 = pneg %p73
        %p320 = pneg %p70
        %p321 = pneg %p94
        %p322 = pneg %p91
        %p323 = pneg %p115
        %p324 = pneg %p112
        %p325 = pneg %p136
        %p326 = pneg %p133
        %p327 = pneg %p157
        %p328 = pneg %p154
        %p329 = pneg %p183
        %p330 = pneg %p180
        %s331 = sand.u32 %s170, 1
        %s332 = scalar_lea.sflag [#allocation4], %s331
        %s333 = sand.u32 %s170, 1
        %s334 = smul.addr %s333, 512
        %s335 = scalar_lea.vmem [#allocation8], %s334
        %s336 = smul.u32 64, %s26
        %s337 = ssub.s32 150, %s336
        %p338 = scmp.lt.s32.totalorder %s337, 64
        %s339 = scalar_select %p338, %s337, 64
        %s340 = smul.u32 128, %s339
        %s341 = smul.u32 64, %s26
        %s342 = ssub.s32 150, %s341
        %p343 = scmp.lt.s32.totalorder %s342, 64
        %s344 = scalar_select %p343, %s342, 64
        %s345 = smul.u32 128, %s344
        %s346 = smul.u32 64, %s26
        %s347 = ssub.s32 150, %s346
        %p348 = scmp.lt.s32.totalorder %s347, 64
        %s349 = scalar_select %p348, %s347, 64
        %s350 = smul.u32 128, %s349
        %v352 = vld [vmem:[%s2] sm:$0x1]
        %v353 = vld [vmem:[%s3] sm:$0x1]
        %v354 = vld [vmem:[%s289] sm:$0xff]
        %v355 = vld [vmem:[%s289 + $0x8] sm:$0xff]
        %v356 = vld [vmem:[%s289 + $0x10] sm:$0xff]
        %v357 = vld [vmem:[%s289 + $0x18] sm:$0xff]
        %v358 = vld [vmem:[%s289 + $0x20] sm:$0xff]
        %v359 = vld [vmem:[%s289 + $0x28] sm:$0xff]
        %v360 = vld [vmem:[%s289 + $0x30] sm:$0xff]
        %v361 = vld [vmem:[%s289 + $0x38] sm:$0xff]
        %v362 = vld [vmem:[%s289 + $0x40] sm:$0xff]
        %v363 = vld [vmem:[%s289 + $0x48] sm:$0xff]
        %v364 = vld [vmem:[%s289 + $0x50] sm:$0xff]
        %v365 = vld [vmem:[%s289 + $0x58] sm:$0xff]
        %v366 = vld [vmem:[%s289 + $0x60] sm:$0xff]
        %v367 = vld [vmem:[%s289 + $0x68] sm:$0xff]
        %v368 = vld [vmem:[%s289 + $0x70] sm:$0xff]
        %v369 = vld [vmem:[%s289 + $0x78] sm:$0xff]
        %v370 = vld [vmem:[%s289 + $0x80] sm:$0xff]
        %v371 = vld [vmem:[%s289 + $0x88] sm:$0xff]
        %v372 = vld [vmem:[%s289 + $0x90] sm:$0xff]
        %v373 = vld [vmem:[%s289 + $0x98] sm:$0xff]
        %v374 = vld [vmem:[%s289 + $0xa0] sm:$0xff]
        %v375 = vld [vmem:[%s289 + $0xa8] sm:$0xff]
        %v376 = vld [vmem:[%s289 + $0xb0] sm:$0xff]
        %v377 = vld [vmem:[%s289 + $0xb8] sm:$0xff]
        %v378 = vld [vmem:[%s289 + $0xc0] sm:$0xff]
        %v379 = vld [vmem:[%s289 + $0xc8] sm:$0xff]
        %v380 = vld [vmem:[%s289 + $0xd0] sm:$0xff]
        %v381 = vld [vmem:[%s289 + $0xd8] sm:$0xff]
        %v382 = vld [vmem:[%s289 + $0xe0] sm:$0xff]
        %v383 = vld [vmem:[%s289 + $0xe8] sm:$0xff]
        %v384 = vld [vmem:[%s289 + $0xf0] sm:$0xff]
        %v385 = vld [vmem:[%s289 + $0xf8] sm:$0xff]
        %v386 = vld [vmem:[%s289 + $0x100] sm:$0xff]
        %v387 = vld [vmem:[%s289 + $0x108] sm:$0xff]
        %v388 = vld [vmem:[%s289 + $0x110] sm:$0xff]
        %v389 = vld [vmem:[%s289 + $0x118] sm:$0xff]
        %v390 = vld [vmem:[%s289 + $0x120] sm:$0xff]
        %v391 = vld [vmem:[%s289 + $0x128] sm:$0xff]
        %v392 = vld [vmem:[%s289 + $0x130] sm:$0xff]
        %v393 = vld [vmem:[%s289 + $0x138] sm:$0xff]
        %v394 = vld [vmem:[%s289 + $0x140] sm:$0xff]
        %v395 = vld [vmem:[%s289 + $0x148] sm:$0xff]
        %v396 = vld [vmem:[%s289 + $0x150] sm:$0xff]
        %v397 = vld [vmem:[%s289 + $0x158] sm:$0xff]
        %v398 = vld [vmem:[%s289 + $0x160] sm:$0xff]
        %v399 = vld [vmem:[%s289 + $0x168] sm:$0xff]
        %v400 = vld [vmem:[%s289 + $0x170] sm:$0xff]
        %v401 = vld [vmem:[%s289 + $0x178] sm:$0xff]
        %v402 = vld [vmem:[%s289 + $0x180] sm:$0xff]
        %v403 = vld [vmem:[%s289 + $0x188] sm:$0xff]
        %v404 = vld [vmem:[%s289 + $0x190] sm:$0xff]
        %v405 = vld [vmem:[%s289 + $0x198] sm:$0xff]
        %v406 = vld [vmem:[%s289 + $0x1a0] sm:$0xff]
        %v407 = vld [vmem:[%s289 + $0x1a8] sm:$0xff]
        %v408 = vld [vmem:[%s289 + $0x1b0] sm:$0xff]
        %v409 = vld [vmem:[%s289 + $0x1b8] sm:$0xff]
        %v410 = vld [vmem:[%s289 + $0x1c0] sm:$0xff]
        %v411 = vld [vmem:[%s289 + $0x1c8] sm:$0xff]
        %v412 = vld [vmem:[%s289 + $0x1d0] sm:$0xff]
        %v413 = vld [vmem:[%s289 + $0x1d8] sm:$0xff]
        %v414 = vld [vmem:[%s289 + $0x1e0] sm:$0xff]
        %v415 = vld [vmem:[%s289 + $0x1e8] sm:$0xff]
        %v416 = vld [vmem:[%s289 + $0x1f0] sm:$0xff]
        %v417 = vld [vmem:[%s289 + $0x1f8] sm:$0xff]
        %418 = vadd.xlane.f32.xlu0 %v354
        %v419 = vpop.xlane.xlu0 %418
        %420 = vadd.xlane.f32.xlu0 %v355
        %v421 = vpop.xlane.xlu0 %420
        %422 = vadd.xlane.f32.xlu0 %v356
        %v423 = vpop.xlane.xlu0 %422
        %424 = vadd.xlane.f32.xlu0 %v357
        %v425 = vpop.xlane.xlu0 %424
        %426 = vadd.xlane.f32.xlu0 %v358
        %v427 = vpop.xlane.xlu0 %426
        %428 = vadd.xlane.f32.xlu0 %v359
        %v429 = vpop.xlane.xlu0 %428
        %430 = vadd.xlane.f32.xlu0 %v360
        %v431 = vpop.xlane.xlu0 %430
        %432 = vadd.xlane.f32.xlu0 %v361
        %v433 = vpop.xlane.xlu0 %432
        %434 = vadd.xlane.f32.xlu0 %v362
        %v435 = vpop.xlane.xlu0 %434
        %436 = vadd.xlane.f32.xlu0 %v363
        %v437 = vpop.xlane.xlu0 %436
        %438 = vadd.xlane.f32.xlu0 %v364
        %v439 = vpop.xlane.xlu0 %438
        %440 = vadd.xlane.f32.xlu0 %v365
        %v441 = vpop.xlane.xlu0 %440
        %442 = vadd.xlane.f32.xlu0 %v366
        %v443 = vpop.xlane.xlu0 %442
        %444 = vadd.xlane.f32.xlu0 %v367
        %v445 = vpop.xlane.xlu0 %444
        %446 = vadd.xlane.f32.xlu0 %v368
        %v447 = vpop.xlane.xlu0 %446
        %448 = vadd.xlane.f32.xlu0 %v369
        %v449 = vpop.xlane.xlu0 %448
        %450 = vadd.xlane.f32.xlu0 %v370
        %v451 = vpop.xlane.xlu0 %450
        %452 = vadd.xlane.f32.xlu0 %v371
        %v453 = vpop.xlane.xlu0 %452
        %454 = vadd.xlane.f32.xlu0 %v372
        %v455 = vpop.xlane.xlu0 %454
        %456 = vadd.xlane.f32.xlu0 %v373
        %v457 = vpop.xlane.xlu0 %456
        %458 = vadd.xlane.f32.xlu0 %v374
        %v459 = vpop.xlane.xlu0 %458
        %460 = vadd.xlane.f32.xlu0 %v375
        %v461 = vpop.xlane.xlu0 %460
        %462 = vadd.xlane.f32.xlu0 %v376
        %v463 = vpop.xlane.xlu0 %462
        %464 = vadd.xlane.f32.xlu0 %v377
        %v465 = vpop.xlane.xlu0 %464
        %466 = vadd.xlane.f32.xlu0 %v378
        %v467 = vpop.xlane.xlu0 %466
        %468 = vadd.xlane.f32.xlu0 %v379
        %v469 = vpop.xlane.xlu0 %468
        %470 = vadd.xlane.f32.xlu0 %v380
        %v471 = vpop.xlane.xlu0 %470
        %472 = vadd.xlane.f32.xlu0 %v381
        %v473 = vpop.xlane.xlu0 %472
        %474 = vadd.xlane.f32.xlu0 %v382
        %v475 = vpop.xlane.xlu0 %474
        %476 = vadd.xlane.f32.xlu0 %v383
        %v477 = vpop.xlane.xlu0 %476
        %478 = vadd.xlane.f32.xlu0 %v384
        %v479 = vpop.xlane.xlu0 %478
        %480 = vadd.xlane.f32.xlu0 %v385
        %v481 = vpop.xlane.xlu0 %480
        %482 = vadd.xlane.f32.xlu0 %v386
        %v483 = vpop.xlane.xlu0 %482
        %484 = vadd.xlane.f32.xlu0 %v387
        %v485 = vpop.xlane.xlu0 %484
        %486 = vadd.xlane.f32.xlu0 %v388
        %v487 = vpop.xlane.xlu0 %486
        %488 = vadd.xlane.f32.xlu0 %v389
        %v489 = vpop.xlane.xlu0 %488
        %490 = vadd.xlane.f32.xlu0 %v390
        %v491 = vpop.xlane.xlu0 %490
        %492 = vadd.xlane.f32.xlu0 %v391
        %v493 = vpop.xlane.xlu0 %492
        %494 = vadd.xlane.f32.xlu0 %v392
        %v495 = vpop.xlane.xlu0 %494
        %496 = vadd.xlane.f32.xlu0 %v393
        %v497 = vpop.xlane.xlu0 %496
        %498 = vadd.xlane.f32.xlu0 %v394
        %v499 = vpop.xlane.xlu0 %498
        %500 = vadd.xlane.f32.xlu0 %v395
        %v501 = vpop.xlane.xlu0 %500
        %502 = vadd.xlane.f32.xlu0 %v396
        %v503 = vpop.xlane.xlu0 %502
        %504 = vadd.xlane.f32.xlu0 %v397
        %v505 = vpop.xlane.xlu0 %504
        %506 = vadd.xlane.f32.xlu0 %v398
        %v507 = vpop.xlane.xlu0 %506
        %508 = vadd.xlane.f32.xlu0 %v399
        %v509 = vpop.xlane.xlu0 %508
        %510 = vadd.xlane.f32.xlu0 %v400
        %v511 = vpop.xlane.xlu0 %510
        %512 = vadd.xlane.f32.xlu0 %v401
        %v513 = vpop.xlane.xlu0 %512
        %514 = vadd.xlane.f32.xlu0 %v402
        %v515 = vpop.xlane.xlu0 %514
        %516 = vadd.xlane.f32.xlu0 %v403
        %v517 = vpop.xlane.xlu0 %516
        %518 = vadd.xlane.f32.xlu0 %v404
        %v519 = vpop.xlane.xlu0 %518
        %520 = vadd.xlane.f32.xlu0 %v405
        %v521 = vpop.xlane.xlu0 %520
        %522 = vadd.xlane.f32.xlu0 %v406
        %v523 = vpop.xlane.xlu0 %522
        %524 = vadd.xlane.f32.xlu0 %v407
        %v525 = vpop.xlane.xlu0 %524
        %526 = vadd.xlane.f32.xlu0 %v408
        %v527 = vpop.xlane.xlu0 %526
        %528 = vadd.xlane.f32.xlu0 %v409
        %v529 = vpop.xlane.xlu0 %528
        %530 = vadd.xlane.f32.xlu0 %v410
        %v531 = vpop.xlane.xlu0 %530
        %532 = vadd.xlane.f32.xlu0 %v411
        %v533 = vpop.xlane.xlu0 %532
        %534 = vadd.xlane.f32.xlu0 %v412
        %v535 = vpop.xlane.xlu0 %534
        %536 = vadd.xlane.f32.xlu0 %v413
        %v537 = vpop.xlane.xlu0 %536
        %538 = vadd.xlane.f32.xlu0 %v414
        %v539 = vpop.xlane.xlu0 %538
        %540 = vadd.xlane.f32.xlu0 %v415
        %v541 = vpop.xlane.xlu0 %540
        %542 = vadd.xlane.f32.xlu0 %v416
        %v543 = vpop.xlane.xlu0 %542
        %544 = vadd.xlane.f32.xlu0 %v417
        %v545 = vpop.xlane.xlu0 %544
        %v546 = vrcp.pop 128.0
        %v547 = vmul.f32 %v419, %v546
        %v548 = vmul.f32 %v421, %v546
        %v549 = vmul.f32 %v423, %v546
        %v550 = vmul.f32 %v425, %v546
        %v551 = vmul.f32 %v427, %v546
        %v552 = vmul.f32 %v429, %v546
        %v553 = vmul.f32 %v431, %v546
        %v554 = vmul.f32 %v433, %v546
        %v555 = vmul.f32 %v435, %v546
        %v556 = vmul.f32 %v437, %v546
        %v557 = vmul.f32 %v439, %v546
        %v558 = vmul.f32 %v441, %v546
        %v559 = vmul.f32 %v443, %v546
        %v560 = vmul.f32 %v445, %v546
        %v561 = vmul.f32 %v447, %v546
        %v562 = vmul.f32 %v449, %v546
        %v563 = vmul.f32 %v451, %v546
        %v564 = vmul.f32 %v453, %v546
        %v565 = vmul.f32 %v455, %v546
        %v566 = vmul.f32 %v457, %v546
        %v567 = vmul.f32 %v459, %v546
        %v568 = vmul.f32 %v461, %v546
        %v569 = vmul.f32 %v463, %v546
        %v570 = vmul.f32 %v465, %v546
        %v571 = vmul.f32 %v467, %v546
        %v572 = vmul.f32 %v469, %v546
        %v573 = vmul.f32 %v471, %v546
        %v574 = vmul.f32 %v473, %v546
        %v575 = vmul.f32 %v475, %v546
        %v576 = vmul.f32 %v477, %v546
        %v577 = vmul.f32 %v479, %v546
        %v578 = vmul.f32 %v481, %v546
        %v579 = vmul.f32 %v483, %v546
        %v580 = vmul.f32 %v485, %v546
        %v581 = vmul.f32 %v487, %v546
        %v582 = vmul.f32 %v489, %v546
        %v583 = vmul.f32 %v491, %v546
        %v584 = vmul.f32 %v493, %v546
        %v585 = vmul.f32 %v495, %v546
        %v586 = vmul.f32 %v497, %v546
        %v587 = vmul.f32 %v499, %v546
        %v588 = vmul.f32 %v501, %v546
        %v589 = vmul.f32 %v503, %v546
        %v590 = vmul.f32 %v505, %v546
        %v591 = vmul.f32 %v507, %v546
        %v592 = vmul.f32 %v509, %v546
        %v593 = vmul.f32 %v511, %v546
        %v594 = vmul.f32 %v513, %v546
        %v595 = vmul.f32 %v515, %v546
        %v596 = vmul.f32 %v517, %v546
        %v597 = vmul.f32 %v519, %v546
        %v598 = vmul.f32 %v521, %v546
        %v599 = vmul.f32 %v523, %v546
        %v600 = vmul.f32 %v525, %v546
        %v601 = vmul.f32 %v527, %v546
        %v602 = vmul.f32 %v529, %v546
        %v603 = vmul.f32 %v531, %v546
        %v604 = vmul.f32 %v533, %v546
        %v605 = vmul.f32 %v535, %v546
        %v606 = vmul.f32 %v537, %v546
        %v607 = vmul.f32 %v539, %v546
        %v608 = vmul.f32 %v541, %v546
        %v609 = vmul.f32 %v543, %v546
        %v610 = vmul.f32 %v545, %v546
        %v611 = vsub.f32 %v354, %v547
        %v612 = vsub.f32 %v355, %v548
        %v613 = vsub.f32 %v356, %v549
        %v614 = vsub.f32 %v357, %v550
        %v615 = vsub.f32 %v358, %v551
        %v616 = vsub.f32 %v359, %v552
        %v617 = vsub.f32 %v360, %v553
        %v618 = vsub.f32 %v361, %v554
        %v619 = vsub.f32 %v362, %v555
        %v620 = vsub.f32 %v363, %v556
        %v621 = vsub.f32 %v364, %v557
        %v622 = vsub.f32 %v365, %v558
        %v623 = vsub.f32 %v366, %v559
        %v624 = vsub.f32 %v367, %v560
        %v625 = vsub.f32 %v368, %v561
        %v626 = vsub.f32 %v369, %v562
        %v627 = vsub.f32 %v370, %v563
        %v628 = vsub.f32 %v371, %v564
        %v629 = vsub.f32 %v372, %v565
        %v630 = vsub.f32 %v373, %v566
        %v631 = vsub.f32 %v374, %v567
        %v632 = vsub.f32 %v375, %v568
        %v633 = vsub.f32 %v376, %v569
        %v634 = vsub.f32 %v377, %v570
        %v635 = vsub.f32 %v378, %v571
        %v636 = vsub.f32 %v379, %v572
        %v637 = vsub.f32 %v380, %v573
        %v638 = vsub.f32 %v381, %v574
        %v639 = vsub.f32 %v382, %v575
        %v640 = vsub.f32 %v383, %v576
        %v641 = vsub.f32 %v384, %v577
        %v642 = vsub.f32 %v385, %v578
        %v643 = vsub.f32 %v386, %v579
        %v644 = vsub.f32 %v387, %v580
        %v645 = vsub.f32 %v388, %v581
        %v646 = vsub.f32 %v389, %v582
        %v647 = vsub.f32 %v390, %v583
        %v648 = vsub.f32 %v391, %v584
        %v649 = vsub.f32 %v392, %v585
        %v650 = vsub.f32 %v393, %v586
        %v651 = vsub.f32 %v394, %v587
        %v652 = vsub.f32 %v395, %v588
        %v653 = vsub.f32 %v396, %v589
        %v654 = vsub.f32 %v397, %v590
        %v655 = vsub.f32 %v398, %v591
        %v656 = vsub.f32 %v399, %v592
        %v657 = vsub.f32 %v400, %v593
        %v658 = vsub.f32 %v401, %v594
        %v659 = vsub.f32 %v402, %v595
        %v660 = vsub.f32 %v403, %v596
        %v661 = vsub.f32 %v404, %v597
        %v662 = vsub.f32 %v405, %v598
        %v663 = vsub.f32 %v406, %v599
        %v664 = vsub.f32 %v407, %v600
        %v665 = vsub.f32 %v408, %v601
        %v666 = vsub.f32 %v409, %v602
        %v667 = vsub.f32 %v410, %v603
        %v668 = vsub.f32 %v411, %v604
        %v669 = vsub.f32 %v412, %v605
        %v670 = vsub.f32 %v413, %v606
        %v671 = vsub.f32 %v414, %v607
        %v672 = vsub.f32 %v415, %v608
        %v673 = vsub.f32 %v416, %v609
        %v674 = vsub.f32 %v417, %v610
        %v675 = vmul.f32 %v611, %v611
        %v676 = vmul.f32 %v612, %v612
        %v677 = vmul.f32 %v613, %v613
        %v678 = vmul.f32 %v614, %v614
        %v679 = vmul.f32 %v615, %v615
        %v680 = vmul.f32 %v616, %v616
        %v681 = vmul.f32 %v617, %v617
        %v682 = vmul.f32 %v618, %v618
        %v683 = vmul.f32 %v619, %v619
        %v684 = vmul.f32 %v620, %v620
        %v685 = vmul.f32 %v621, %v621
        %v686 = vmul.f32 %v622, %v622
        %v687 = vmul.f32 %v623, %v623
        %v688 = vmul.f32 %v624, %v624
        %v689 = vmul.f32 %v625, %v625
        %v690 = vmul.f32 %v626, %v626
        %v691 = vmul.f32 %v627, %v627
        %v692 = vmul.f32 %v628, %v628
        %v693 = vmul.f32 %v629, %v629
        %v694 = vmul.f32 %v630, %v630
        %v695 = vmul.f32 %v631, %v631
        %v696 = vmul.f32 %v632, %v632
        %v697 = vmul.f32 %v633, %v633
        %v698 = vmul.f32 %v634, %v634
        %v699 = vmul.f32 %v635, %v635
        %v700 = vmul.f32 %v636, %v636
        %v701 = vmul.f32 %v637, %v637
        %v702 = vmul.f32 %v638, %v638
        %v703 = vmul.f32 %v639, %v639
        %v704 = vmul.f32 %v640, %v640
        %v705 = vmul.f32 %v641, %v641
        %v706 = vmul.f32 %v642, %v642
        %v707 = vmul.f32 %v643, %v643
        %v708 = vmul.f32 %v644, %v644
        %v709 = vmul.f32 %v645, %v645
        %v710 = vmul.f32 %v646, %v646
        %v711 = vmul.f32 %v647, %v647
        %v712 = vmul.f32 %v648, %v648
        %v713 = vmul.f32 %v649, %v649
        %v714 = vmul.f32 %v650, %v650
        %v715 = vmul.f32 %v651, %v651
        %v716 = vmul.f32 %v652, %v652
        %v717 = vmul.f32 %v653, %v653
        %v718 = vmul.f32 %v654, %v654
        %v719 = vmul.f32 %v655, %v655
        %v720 = vmul.f32 %v656, %v656
        %v721 = vmul.f32 %v657, %v657
        %v722 = vmul.f32 %v658, %v658
        %v723 = vmul.f32 %v659, %v659
        %v724 = vmul.f32 %v660, %v660
        %v725 = vmul.f32 %v661, %v661
        %v726 = vmul.f32 %v662, %v662
        %v727 = vmul.f32 %v663, %v663
        %v728 = vmul.f32 %v664, %v664
        %v729 = vmul.f32 %v665, %v665
        %v730 = vmul.f32 %v666, %v666
        %v731 = vmul.f32 %v667, %v667
        %v732 = vmul.f32 %v668, %v668
        %v733 = vmul.f32 %v669, %v669
        %v734 = vmul.f32 %v670, %v670
        %v735 = vmul.f32 %v671, %v671
        %v736 = vmul.f32 %v672, %v672
        %v737 = vmul.f32 %v673, %v673
        %v738 = vmul.f32 %v674, %v674
        %739 = vadd.xlane.f32.xlu0 %v675
        %v740 = vpop.xlane.xlu0 %739
        %741 = vadd.xlane.f32.xlu0 %v676
        %v742 = vpop.xlane.xlu0 %741
        %743 = vadd.xlane.f32.xlu0 %v677
        %v744 = vpop.xlane.xlu0 %743
        %745 = vadd.xlane.f32.xlu0 %v678
        %v746 = vpop.xlane.xlu0 %745
        %747 = vadd.xlane.f32.xlu0 %v679
        %v748 = vpop.xlane.xlu0 %747
        %749 = vadd.xlane.f32.xlu0 %v680
        %v750 = vpop.xlane.xlu0 %749
        %751 = vadd.xlane.f32.xlu0 %v681
        %v752 = vpop.xlane.xlu0 %751
        %753 = vadd.xlane.f32.xlu0 %v682
        %v754 = vpop.xlane.xlu0 %753
        %755 = vadd.xlane.f32.xlu0 %v683
        %v756 = vpop.xlane.xlu0 %755
        %757 = vadd.xlane.f32.xlu0 %v684
        %v758 = vpop.xlane.xlu0 %757
        %759 = vadd.xlane.f32.xlu0 %v685
        %v760 = vpop.xlane.xlu0 %759
        %761 = vadd.xlane.f32.xlu0 %v686
        %v762 = vpop.xlane.xlu0 %761
        %763 = vadd.xlane.f32.xlu0 %v687
        %v764 = vpop.xlane.xlu0 %763
        %765 = vadd.xlane.f32.xlu0 %v688
        %v766 = vpop.xlane.xlu0 %765
        %767 = vadd.xlane.f32.xlu0 %v689
        %v768 = vpop.xlane.xlu0 %767
        %769 = vadd.xlane.f32.xlu0 %v690
        %v770 = vpop.xlane.xlu0 %769
        %771 = vadd.xlane.f32.xlu0 %v691
        %v772 = vpop.xlane.xlu0 %771
        %773 = vadd.xlane.f32.xlu0 %v692
        %v774 = vpop.xlane.xlu0 %773
        %775 = vadd.xlane.f32.xlu0 %v693
        %v776 = vpop.xlane.xlu0 %775
        %777 = vadd.xlane.f32.xlu0 %v694
        %v778 = vpop.xlane.xlu0 %777
        %779 = vadd.xlane.f32.xlu0 %v695
        %v780 = vpop.xlane.xlu0 %779
        %781 = vadd.xlane.f32.xlu0 %v696
        %v782 = vpop.xlane.xlu0 %781
        %783 = vadd.xlane.f32.xlu0 %v697
        %v784 = vpop.xlane.xlu0 %783
        %785 = vadd.xlane.f32.xlu0 %v698
        %v786 = vpop.xlane.xlu0 %785
        %787 = vadd.xlane.f32.xlu0 %v699
        %v788 = vpop.xlane.xlu0 %787
        %789 = vadd.xlane.f32.xlu0 %v700
        %v790 = vpop.xlane.xlu0 %789
        %791 = vadd.xlane.f32.xlu0 %v701
        %v792 = vpop.xlane.xlu0 %791
        %793 = vadd.xlane.f32.xlu0 %v702
        %v794 = vpop.xlane.xlu0 %793
        %795 = vadd.xlane.f32.xlu0 %v703
        %v796 = vpop.xlane.xlu0 %795
        %797 = vadd.xlane.f32.xlu0 %v704
        %v798 = vpop.xlane.xlu0 %797
        %799 = vadd.xlane.f32.xlu0 %v705
        %v800 = vpop.xlane.xlu0 %799
        %801 = vadd.xlane.f32.xlu0 %v706
        %v802 = vpop.xlane.xlu0 %801
        %803 = vadd.xlane.f32.xlu0 %v707
        %v804 = vpop.xlane.xlu0 %803
        %805 = vadd.xlane.f32.xlu0 %v708
        %v806 = vpop.xlane.xlu0 %805
        %807 = vadd.xlane.f32.xlu0 %v709
        %v808 = vpop.xlane.xlu0 %807
        %809 = vadd.xlane.f32.xlu0 %v710
        %v810 = vpop.xlane.xlu0 %809
        %811 = vadd.xlane.f32.xlu0 %v711
        %v812 = vpop.xlane.xlu0 %811
        %813 = vadd.xlane.f32.xlu0 %v712
        %v814 = vpop.xlane.xlu0 %813
        %815 = vadd.xlane.f32.xlu0 %v713
        %v816 = vpop.xlane.xlu0 %815
        %817 = vadd.xlane.f32.xlu0 %v714
        %v818 = vpop.xlane.xlu0 %817
        %819 = vadd.xlane.f32.xlu0 %v715
        %v820 = vpop.xlane.xlu0 %819
        %821 = vadd.xlane.f32.xlu0 %v716
        %v822 = vpop.xlane.xlu0 %821
        %823 = vadd.xlane.f32.xlu0 %v717
        %v824 = vpop.xlane.xlu0 %823
        %825 = vadd.xlane.f32.xlu0 %v718
        %v826 = vpop.xlane.xlu0 %825
        %827 = vadd.xlane.f32.xlu0 %v719
        %v828 = vpop.xlane.xlu0 %827
        %829 = vadd.xlane.f32.xlu0 %v720
        %v830 = vpop.xlane.xlu0 %829
        %831 = vadd.xlane.f32.xlu0 %v721
        %v832 = vpop.xlane.xlu0 %831
        %833 = vadd.xlane.f32.xlu0 %v722
        %v834 = vpop.xlane.xlu0 %833
        %835 = vadd.xlane.f32.xlu0 %v723
        %v836 = vpop.xlane.xlu0 %835
        %837 = vadd.xlane.f32.xlu0 %v724
        %v838 = vpop.xlane.xlu0 %837
        %839 = vadd.xlane.f32.xlu0 %v725
        %v840 = vpop.xlane.xlu0 %839
        %841 = vadd.xlane.f32.xlu0 %v726
        %v842 = vpop.xlane.xlu0 %841
        %843 = vadd.xlane.f32.xlu0 %v727
        %v844 = vpop.xlane.xlu0 %843
        %845 = vadd.xlane.f32.xlu0 %v728
        %v846 = vpop.xlane.xlu0 %845
        %847 = vadd.xlane.f32.xlu0 %v729
        %v848 = vpop.xlane.xlu0 %847
        %849 = vadd.xlane.f32.xlu0 %v730
        %v850 = vpop.xlane.xlu0 %849
        %851 = vadd.xlane.f32.xlu0 %v731
        %v852 = vpop.xlane.xlu0 %851
        %853 = vadd.xlane.f32.xlu0 %v732
        %v854 = vpop.xlane.xlu0 %853
        %855 = vadd.xlane.f32.xlu0 %v733
        %v856 = vpop.xlane.xlu0 %855
        %857 = vadd.xlane.f32.xlu0 %v734
        %v858 = vpop.xlane.xlu0 %857
        %859 = vadd.xlane.f32.xlu0 %v735
        %v860 = vpop.xlane.xlu0 %859
        %861 = vadd.xlane.f32.xlu0 %v736
        %v862 = vpop.xlane.xlu0 %861
        %863 = vadd.xlane.f32.xlu0 %v737
        %v864 = vpop.xlane.xlu0 %863
        %865 = vadd.xlane.f32.xlu0 %v738
        %v866 = vpop.xlane.xlu0 %865
        %v867 = vmul.f32 %v740, %v546
        %v868 = vmul.f32 %v742, %v546
        %v869 = vmul.f32 %v744, %v546
        %v870 = vmul.f32 %v746, %v546
        %v871 = vmul.f32 %v748, %v546
        %v872 = vmul.f32 %v750, %v546
        %v873 = vmul.f32 %v752, %v546
        %v874 = vmul.f32 %v754, %v546
        %v875 = vmul.f32 %v756, %v546
        %v876 = vmul.f32 %v758, %v546
        %v877 = vmul.f32 %v760, %v546
        %v878 = vmul.f32 %v762, %v546
        %v879 = vmul.f32 %v764, %v546
        %v880 = vmul.f32 %v766, %v546
        %v881 = vmul.f32 %v768, %v546
        %v882 = vmul.f32 %v770, %v546
        %v883 = vmul.f32 %v772, %v546
        %v884 = vmul.f32 %v774, %v546
        %v885 = vmul.f32 %v776, %v546
        %v886 = vmul.f32 %v778, %v546
        %v887 = vmul.f32 %v780, %v546
        %v888 = vmul.f32 %v782, %v546
        %v889 = vmul.f32 %v784, %v546
        %v890 = vmul.f32 %v786, %v546
        %v891 = vmul.f32 %v788, %v546
        %v892 = vmul.f32 %v790, %v546
        %v893 = vmul.f32 %v792, %v546
        %v894 = vmul.f32 %v794, %v546
        %v895 = vmul.f32 %v796, %v546
        %v896 = vmul.f32 %v798, %v546
        %v897 = vmul.f32 %v800, %v546
        %v898 = vmul.f32 %v802, %v546
        %v899 = vmul.f32 %v804, %v546
        %v900 = vmul.f32 %v806, %v546
        %v901 = vmul.f32 %v808, %v546
        %v902 = vmul.f32 %v810, %v546
        %v903 = vmul.f32 %v812, %v546
        %v904 = vmul.f32 %v814, %v546
        %v905 = vmul.f32 %v816, %v546
        %v906 = vmul.f32 %v818, %v546
        %v907 = vmul.f32 %v820, %v546
        %v908 = vmul.f32 %v822, %v546
        %v909 = vmul.f32 %v824, %v546
        %v910 = vmul.f32 %v826, %v546
        %v911 = vmul.f32 %v828, %v546
        %v912 = vmul.f32 %v830, %v546
        %v913 = vmul.f32 %v832, %v546
        %v914 = vmul.f32 %v834, %v546
        %v915 = vmul.f32 %v836, %v546
        %v916 = vmul.f32 %v838, %v546
        %v917 = vmul.f32 %v840, %v546
        %v918 = vmul.f32 %v842, %v546
        %v919 = vmul.f32 %v844, %v546
        %v920 = vmul.f32 %v846, %v546
        %v921 = vmul.f32 %v848, %v546
        %v922 = vmul.f32 %v850, %v546
        %v923 = vmul.f32 %v852, %v546
        %v924 = vmul.f32 %v854, %v546
        %v925 = vmul.f32 %v856, %v546
        %v926 = vmul.f32 %v858, %v546
        %v927 = vmul.f32 %v860, %v546
        %v928 = vmul.f32 %v862, %v546
        %v929 = vmul.f32 %v864, %v546
        %v930 = vmul.f32 %v866, %v546
        %v931 = vadd.f32 %v867, 1e-05
        %v932 = vadd.f32 %v868, 1e-05
        %v933 = vadd.f32 %v869, 1e-05
        %v934 = vadd.f32 %v870, 1e-05
        %v935 = vadd.f32 %v871, 1e-05
        %v936 = vadd.f32 %v872, 1e-05
        %v937 = vadd.f32 %v873, 1e-05
        %v938 = vadd.f32 %v874, 1e-05
        %v939 = vadd.f32 %v875, 1e-05
        %v940 = vadd.f32 %v876, 1e-05
        %v941 = vadd.f32 %v877, 1e-05
        %v942 = vadd.f32 %v878, 1e-05
        %v943 = vadd.f32 %v879, 1e-05
        %v944 = vadd.f32 %v880, 1e-05
        %v945 = vadd.f32 %v881, 1e-05
        %v946 = vadd.f32 %v882, 1e-05
        %v947 = vadd.f32 %v883, 1e-05
        %v948 = vadd.f32 %v884, 1e-05
        %v949 = vadd.f32 %v885, 1e-05
        %v950 = vadd.f32 %v886, 1e-05
        %v951 = vadd.f32 %v887, 1e-05
        %v952 = vadd.f32 %v888, 1e-05
        %v953 = vadd.f32 %v889, 1e-05
        %v954 = vadd.f32 %v890, 1e-05
        %v955 = vadd.f32 %v891, 1e-05
        %v956 = vadd.f32 %v892, 1e-05
        %v957 = vadd.f32 %v893, 1e-05
        %v958 = vadd.f32 %v894, 1e-05
        %v959 = vadd.f32 %v895, 1e-05
        %v960 = vadd.f32 %v896, 1e-05
        %v961 = vadd.f32 %v897, 1e-05
        %v962 = vadd.f32 %v898, 1e-05
        %v963 = vadd.f32 %v899, 1e-05
        %v964 = vadd.f32 %v900, 1e-05
        %v965 = vadd.f32 %v901, 1e-05
        %v966 = vadd.f32 %v902, 1e-05
        %v967 = vadd.f32 %v903, 1e-05
        %v968 = vadd.f32 %v904, 1e-05
        %v969 = vadd.f32 %v905, 1e-05
        %v970 = vadd.f32 %v906, 1e-05
        %v971 = vadd.f32 %v907, 1e-05
        %v972 = vadd.f32 %v908, 1e-05
        %v973 = vadd.f32 %v909, 1e-05
        %v974 = vadd.f32 %v910, 1e-05
        %v975 = vadd.f32 %v911, 1e-05
        %v976 = vadd.f32 %v912, 1e-05
        %v977 = vadd.f32 %v913, 1e-05
        %v978 = vadd.f32 %v914, 1e-05
        %v979 = vadd.f32 %v915, 1e-05
        %v980 = vadd.f32 %v916, 1e-05
        %v981 = vadd.f32 %v917, 1e-05
        %v982 = vadd.f32 %v918, 1e-05
        %v983 = vadd.f32 %v919, 1e-05
        %v984 = vadd.f32 %v920, 1e-05
        %v985 = vadd.f32 %v921, 1e-05
        %v986 = vadd.f32 %v922, 1e-05
        %v987 = vadd.f32 %v923, 1e-05
        %v988 = vadd.f32 %v924, 1e-05
        %v989 = vadd.f32 %v925, 1e-05
        %v990 = vadd.f32 %v926, 1e-05
        %v991 = vadd.f32 %v927, 1e-05
        %v992 = vadd.f32 %v928, 1e-05
        %v993 = vadd.f32 %v929, 1e-05
        %v994 = vadd.f32 %v930, 1e-05
        %v995 = vrsqrt.pop %v931
        %v996 = vrsqrt.pop %v932
        %v997 = vrsqrt.pop %v933
        %v998 = vrsqrt.pop %v934
        %v999 = vrsqrt.pop %v935
        %v1000 = vrsqrt.pop %v936
        %v1001 = vrsqrt.pop %v937
        %v1002 = vrsqrt.pop %v938
        %v1003 = vrsqrt.pop %v939
        %v1004 = vrsqrt.pop %v940
        %v1005 = vrsqrt.pop %v941
        %v1006 = vrsqrt.pop %v942
        %v1007 = vrsqrt.pop %v943
        %v1008 = vrsqrt.pop %v944
        %v1009 = vrsqrt.pop %v945
        %v1010 = vrsqrt.pop %v946
        %v1011 = vrsqrt.pop %v947
        %v1012 = vrsqrt.pop %v948
        %v1013 = vrsqrt.pop %v949
        %v1014 = vrsqrt.pop %v950
        %v1015 = vrsqrt.pop %v951
        %v1016 = vrsqrt.pop %v952
        %v1017 = vrsqrt.pop %v953
        %v1018 = vrsqrt.pop %v954
        %v1019 = vrsqrt.pop %v955
        %v1020 = vrsqrt.pop %v956
        %v1021 = vrsqrt.pop %v957
        %v1022 = vrsqrt.pop %v958
        %v1023 = vrsqrt.pop %v959
        %v1024 = vrsqrt.pop %v960
        %v1025 = vrsqrt.pop %v961
        %v1026 = vrsqrt.pop %v962
        %v1027 = vrsqrt.pop %v963
        %v1028 = vrsqrt.pop %v964
        %v1029 = vrsqrt.pop %v965
        %v1030 = vrsqrt.pop %v966
        %v1031 = vrsqrt.pop %v967
        %v1032 = vrsqrt.pop %v968
        %v1033 = vrsqrt.pop %v969
        %v1034 = vrsqrt.pop %v970
        %v1035 = vrsqrt.pop %v971
        %v1036 = vrsqrt.pop %v972
        %v1037 = vrsqrt.pop %v973
        %v1038 = vrsqrt.pop %v974
        %v1039 = vrsqrt.pop %v975
        %v1040 = vrsqrt.pop %v976
        %v1041 = vrsqrt.pop %v977
        %v1042 = vrsqrt.pop %v978
        %v1043 = vrsqrt.pop %v979
        %v1044 = vrsqrt.pop %v980
        %v1045 = vrsqrt.pop %v981
        %v1046 = vrsqrt.pop %v982
        %v1047 = vrsqrt.pop %v983
        %v1048 = vrsqrt.pop %v984
        %v1049 = vrsqrt.pop %v985
        %v1050 = vrsqrt.pop %v986
        %v1051 = vrsqrt.pop %v987
        %v1052 = vrsqrt.pop %v988
        %v1053 = vrsqrt.pop %v989
        %v1054 = vrsqrt.pop %v990
        %v1055 = vrsqrt.pop %v991
        %v1056 = vrsqrt.pop %v992
        %v1057 = vrsqrt.pop %v993
        %v1058 = vrsqrt.pop %v994
        %v1060 = vlaneseq
        %v1061 = vshrl.u32 %v1060, 7
        %v1062 = vsub.s32 0, %v1061
        %v1063 = vrot.slane %v352, %v1062
        %v1065 = vmul.f32 %v995, %v1063
        %v1066 = vmul.f32 %v996, %v1063
        %v1067 = vmul.f32 %v997, %v1063
        %v1068 = vmul.f32 %v998, %v1063
        %v1069 = vmul.f32 %v999, %v1063
        %v1070 = vmul.f32 %v1000, %v1063
        %v1071 = vmul.f32 %v1001, %v1063
        %v1072 = vmul.f32 %v1002, %v1063
        %v1073 = vmul.f32 %v1003, %v1063
        %v1074 = vmul.f32 %v1004, %v1063
        %v1075 = vmul.f32 %v1005, %v1063
        %v1076 = vmul.f32 %v1006, %v1063
        %v1077 = vmul.f32 %v1007, %v1063
        %v1078 = vmul.f32 %v1008, %v1063
        %v1079 = vmul.f32 %v1009, %v1063
        %v1080 = vmul.f32 %v1010, %v1063
        %v1081 = vmul.f32 %v1011, %v1063
        %v1082 = vmul.f32 %v1012, %v1063
        %v1083 = vmul.f32 %v1013, %v1063
        %v1084 = vmul.f32 %v1014, %v1063
        %v1085 = vmul.f32 %v1015, %v1063
        %v1086 = vmul.f32 %v1016, %v1063
        %v1087 = vmul.f32 %v1017, %v1063
        %v1088 = vmul.f32 %v1018, %v1063
        %v1089 = vmul.f32 %v1019, %v1063
        %v1090 = vmul.f32 %v1020, %v1063
        %v1091 = vmul.f32 %v1021, %v1063
        %v1092 = vmul.f32 %v1022, %v1063
        %v1093 = vmul.f32 %v1023, %v1063
        %v1094 = vmul.f32 %v1024, %v1063
        %v1095 = vmul.f32 %v1025, %v1063
        %v1096 = vmul.f32 %v1026, %v1063
        %v1097 = vmul.f32 %v1027, %v1063
        %v1098 = vmul.f32 %v1028, %v1063
        %v1099 = vmul.f32 %v1029, %v1063
        %v1100 = vmul.f32 %v1030, %v1063
        %v1101 = vmul.f32 %v1031, %v1063
        %v1102 = vmul.f32 %v1032, %v1063
        %v1103 = vmul.f32 %v1033, %v1063
        %v1104 = vmul.f32 %v1034, %v1063
        %v1105 = vmul.f32 %v1035, %v1063
        %v1106 = vmul.f32 %v1036, %v1063
        %v1107 = vmul.f32 %v1037, %v1063
        %v1108 = vmul.f32 %v1038, %v1063
        %v1109 = vmul.f32 %v1039, %v1063
        %v1110 = vmul.f32 %v1040, %v1063
        %v1111 = vmul.f32 %v1041, %v1063
        %v1112 = vmul.f32 %v1042, %v1063
        %v1113 = vmul.f32 %v1043, %v1063
        %v1114 = vmul.f32 %v1044, %v1063
        %v1115 = vmul.f32 %v1045, %v1063
        %v1116 = vmul.f32 %v1046, %v1063
        %v1117 = vmul.f32 %v1047, %v1063
        %v1118 = vmul.f32 %v1048, %v1063
        %v1119 = vmul.f32 %v1049, %v1063
        %v1120 = vmul.f32 %v1050, %v1063
        %v1121 = vmul.f32 %v1051, %v1063
        %v1122 = vmul.f32 %v1052, %v1063
        %v1123 = vmul.f32 %v1053, %v1063
        %v1124 = vmul.f32 %v1054, %v1063
        %v1125 = vmul.f32 %v1055, %v1063
        %v1126 = vmul.f32 %v1056, %v1063
        %v1127 = vmul.f32 %v1057, %v1063
        %v1128 = vmul.f32 %v1058, %v1063
        %v1129 = vmul.f32 %v611, %v1065
        %v1130 = vmul.f32 %v612, %v1066
        %v1131 = vmul.f32 %v613, %v1067
        %v1132 = vmul.f32 %v614, %v1068
        %v1133 = vmul.f32 %v615, %v1069
        %v1134 = vmul.f32 %v616, %v1070
        %v1135 = vmul.f32 %v617, %v1071
        %v1136 = vmul.f32 %v618, %v1072
        %v1137 = vmul.f32 %v619, %v1073
        %v1138 = vmul.f32 %v620, %v1074
        %v1139 = vmul.f32 %v621, %v1075
        %v1140 = vmul.f32 %v622, %v1076
        %v1141 = vmul.f32 %v623, %v1077
        %v1142 = vmul.f32 %v624, %v1078
        %v1143 = vmul.f32 %v625, %v1079
        %v1144 = vmul.f32 %v626, %v1080
        %v1145 = vmul.f32 %v627, %v1081
        %v1146 = vmul.f32 %v628, %v1082
        %v1147 = vmul.f32 %v629, %v1083
        %v1148 = vmul.f32 %v630, %v1084
        %v1149 = vmul.f32 %v631, %v1085
        %v1150 = vmul.f32 %v632, %v1086
        %v1151 = vmul.f32 %v633, %v1087
        %v1152 = vmul.f32 %v634, %v1088
        %v1153 = vmul.f32 %v635, %v1089
        %v1154 = vmul.f32 %v636, %v1090
        %v1155 = vmul.f32 %v637, %v1091
        %v1156 = vmul.f32 %v638, %v1092
        %v1157 = vmul.f32 %v639, %v1093
        %v1158 = vmul.f32 %v640, %v1094
        %v1159 = vmul.f32 %v641, %v1095
        %v1160 = vmul.f32 %v642, %v1096
        %v1161 = vmul.f32 %v643, %v1097
        %v1162 = vmul.f32 %v644, %v1098
        %v1163 = vmul.f32 %v645, %v1099
        %v1164 = vmul.f32 %v646, %v1100
        %v1165 = vmul.f32 %v647, %v1101
        %v1166 = vmul.f32 %v648, %v1102
        %v1167 = vmul.f32 %v649, %v1103
        %v1168 = vmul.f32 %v650, %v1104
        %v1169 = vmul.f32 %v651, %v1105
        %v1170 = vmul.f32 %v652, %v1106
        %v1171 = vmul.f32 %v653, %v1107
        %v1172 = vmul.f32 %v654, %v1108
        %v1173 = vmul.f32 %v655, %v1109
        %v1174 = vmul.f32 %v656, %v1110
        %v1175 = vmul.f32 %v657, %v1111
        %v1176 = vmul.f32 %v658, %v1112
        %v1177 = vmul.f32 %v659, %v1113
        %v1178 = vmul.f32 %v660, %v1114
        %v1179 = vmul.f32 %v661, %v1115
        %v1180 = vmul.f32 %v662, %v1116
        %v1181 = vmul.f32 %v663, %v1117
        %v1182 = vmul.f32 %v664, %v1118
        %v1183 = vmul.f32 %v665, %v1119
        %v1184 = vmul.f32 %v666, %v1120
        %v1185 = vmul.f32 %v667, %v1121
        %v1186 = vmul.f32 %v668, %v1122
        %v1187 = vmul.f32 %v669, %v1123
        %v1188 = vmul.f32 %v670, %v1124
        %v1189 = vmul.f32 %v671, %v1125
        %v1190 = vmul.f32 %v672, %v1126
        %v1191 = vmul.f32 %v673, %v1127
        %v1192 = vmul.f32 %v674, %v1128
        %v1194 = vlaneseq
        %v1195 = vshrl.u32 %v1194, 7
        %v1196 = vsub.s32 0, %v1195
        %v1197 = vrot.slane %v353, %v1196
        %v1199 = vadd.f32 %v1129, %v1197
        %v1200 = vadd.f32 %v1130, %v1197
        %v1201 = vadd.f32 %v1131, %v1197
        %v1202 = vadd.f32 %v1132, %v1197
        %v1203 = vadd.f32 %v1133, %v1197
        %v1204 = vadd.f32 %v1134, %v1197
        %v1205 = vadd.f32 %v1135, %v1197
        %v1206 = vadd.f32 %v1136, %v1197
        %v1207 = vadd.f32 %v1137, %v1197
        %v1208 = vadd.f32 %v1138, %v1197
        %v1209 = vadd.f32 %v1139, %v1197
        %v1210 = vadd.f32 %v1140, %v1197
        %v1211 = vadd.f32 %v1141, %v1197
        %v1212 = vadd.f32 %v1142, %v1197
        %v1213 = vadd.f32 %v1143, %v1197
        %v1214 = vadd.f32 %v1144, %v1197
        %v1215 = vadd.f32 %v1145, %v1197
        %v1216 = vadd.f32 %v1146, %v1197
        %v1217 = vadd.f32 %v1147, %v1197
        %v1218 = vadd.f32 %v1148, %v1197
        %v1219 = vadd.f32 %v1149, %v1197
        %v1220 = vadd.f32 %v1150, %v1197
        %v1221 = vadd.f32 %v1151, %v1197
        %v1222 = vadd.f32 %v1152, %v1197
        %v1223 = vadd.f32 %v1153, %v1197
        %v1224 = vadd.f32 %v1154, %v1197
        %v1225 = vadd.f32 %v1155, %v1197
        %v1226 = vadd.f32 %v1156, %v1197
        %v1227 = vadd.f32 %v1157, %v1197
        %v1228 = vadd.f32 %v1158, %v1197
        %v1229 = vadd.f32 %v1159, %v1197
        %v1230 = vadd.f32 %v1160, %v1197
        %v1231 = vadd.f32 %v1161, %v1197
        %v1232 = vadd.f32 %v1162, %v1197
        %v1233 = vadd.f32 %v1163, %v1197
        %v1234 = vadd.f32 %v1164, %v1197
        %v1235 = vadd.f32 %v1165, %v1197
        %v1236 = vadd.f32 %v1166, %v1197
        %v1237 = vadd.f32 %v1167, %v1197
        %v1238 = vadd.f32 %v1168, %v1197
        %v1239 = vadd.f32 %v1169, %v1197
        %v1240 = vadd.f32 %v1170, %v1197
        %v1241 = vadd.f32 %v1171, %v1197
        %v1242 = vadd.f32 %v1172, %v1197
        %v1243 = vadd.f32 %v1173, %v1197
        %v1244 = vadd.f32 %v1174, %v1197
        %v1245 = vadd.f32 %v1175, %v1197
        %v1246 = vadd.f32 %v1176, %v1197
        %v1247 = vadd.f32 %v1177, %v1197
        %v1248 = vadd.f32 %v1178, %v1197
        %v1249 = vadd.f32 %v1179, %v1197
        %v1250 = vadd.f32 %v1180, %v1197
        %v1251 = vadd.f32 %v1181, %v1197
        %v1252 = vadd.f32 %v1182, %v1197
        %v1253 = vadd.f32 %v1183, %v1197
        %v1254 = vadd.f32 %v1184, %v1197
        %v1255 = vadd.f32 %v1185, %v1197
        %v1256 = vadd.f32 %v1186, %v1197
        %v1257 = vadd.f32 %v1187, %v1197
        %v1258 = vadd.f32 %v1188, %v1197
        %v1259 = vadd.f32 %v1189, %v1197
        %v1260 = vadd.f32 %v1190, %v1197
        %v1261 = vadd.f32 %v1191, %v1197
        %v1262 = vadd.f32 %v1192, %v1197
        %v1263 = vld [vmem:[%s298] sm:$0xff]
        %v1264 = vld [vmem:[%s298 + $0x8] sm:$0xff]
        %v1265 = vld [vmem:[%s298 + $0x10] sm:$0xff]
        %v1266 = vld [vmem:[%s298 + $0x18] sm:$0xff]
        %v1267 = vld [vmem:[%s298 + $0x20] sm:$0xff]
        %v1268 = vld [vmem:[%s298 + $0x28] sm:$0xff]
        %v1269 = vld [vmem:[%s298 + $0x30] sm:$0xff]
        %v1270 = vld [vmem:[%s298 + $0x38] sm:$0xff]
        %v1271 = vld [vmem:[%s298 + $0x40] sm:$0xff]
        %v1272 = vld [vmem:[%s298 + $0x48] sm:$0xff]
        %v1273 = vld [vmem:[%s298 + $0x50] sm:$0xff]
        %v1274 = vld [vmem:[%s298 + $0x58] sm:$0xff]
        %v1275 = vld [vmem:[%s298 + $0x60] sm:$0xff]
        %v1276 = vld [vmem:[%s298 + $0x68] sm:$0xff]
        %v1277 = vld [vmem:[%s298 + $0x70] sm:$0xff]
        %v1278 = vld [vmem:[%s298 + $0x78] sm:$0xff]
        %v1279 = vld [vmem:[%s298 + $0x80] sm:$0xff]
        %v1280 = vld [vmem:[%s298 + $0x88] sm:$0xff]
        %v1281 = vld [vmem:[%s298 + $0x90] sm:$0xff]
        %v1282 = vld [vmem:[%s298 + $0x98] sm:$0xff]
        %v1283 = vld [vmem:[%s298 + $0xa0] sm:$0xff]
        %v1284 = vld [vmem:[%s298 + $0xa8] sm:$0xff]
        %v1285 = vld [vmem:[%s298 + $0xb0] sm:$0xff]
        %v1286 = vld [vmem:[%s298 + $0xb8] sm:$0xff]
        %v1287 = vld [vmem:[%s298 + $0xc0] sm:$0xff]
        %v1288 = vld [vmem:[%s298 + $0xc8] sm:$0xff]
        %v1289 = vld [vmem:[%s298 + $0xd0] sm:$0xff]
        %v1290 = vld [vmem:[%s298 + $0xd8] sm:$0xff]
        %v1291 = vld [vmem:[%s298 + $0xe0] sm:$0xff]
        %v1292 = vld [vmem:[%s298 + $0xe8] sm:$0xff]
        %v1293 = vld [vmem:[%s298 + $0xf0] sm:$0xff]
        %v1294 = vld [vmem:[%s298 + $0xf8] sm:$0xff]
        %v1295 = vld [vmem:[%s298 + $0x100] sm:$0xff]
        %v1296 = vld [vmem:[%s298 + $0x108] sm:$0xff]
        %v1297 = vld [vmem:[%s298 + $0x110] sm:$0xff]
        %v1298 = vld [vmem:[%s298 + $0x118] sm:$0xff]
        %v1299 = vld [vmem:[%s298 + $0x120] sm:$0xff]
        %v1300 = vld [vmem:[%s298 + $0x128] sm:$0xff]
        %v1301 = vld [vmem:[%s298 + $0x130] sm:$0xff]
        %v1302 = vld [vmem:[%s298 + $0x138] sm:$0xff]
        %v1303 = vld [vmem:[%s298 + $0x140] sm:$0xff]
        %v1304 = vld [vmem:[%s298 + $0x148] sm:$0xff]
        %v1305 = vld [vmem:[%s298 + $0x150] sm:$0xff]
        %v1306 = vld [vmem:[%s298 + $0x158] sm:$0xff]
        %v1307 = vld [vmem:[%s298 + $0x160] sm:$0xff]
        %v1308 = vld [vmem:[%s298 + $0x168] sm:$0xff]
        %v1309 = vld [vmem:[%s298 + $0x170] sm:$0xff]
        %v1310 = vld [vmem:[%s298 + $0x178] sm:$0xff]
        %v1311 = vld [vmem:[%s298 + $0x180] sm:$0xff]
        %v1312 = vld [vmem:[%s298 + $0x188] sm:$0xff]
        %v1313 = vld [vmem:[%s298 + $0x190] sm:$0xff]
        %v1314 = vld [vmem:[%s298 + $0x198] sm:$0xff]
        %v1315 = vld [vmem:[%s298 + $0x1a0] sm:$0xff]
        %v1316 = vld [vmem:[%s298 + $0x1a8] sm:$0xff]
        %v1317 = vld [vmem:[%s298 + $0x1b0] sm:$0xff]
        %v1318 = vld [vmem:[%s298 + $0x1b8] sm:$0xff]
        %v1319 = vld [vmem:[%s298 + $0x1c0] sm:$0xff]
        %v1320 = vld [vmem:[%s298 + $0x1c8] sm:$0xff]
        %v1321 = vld [vmem:[%s298 + $0x1d0] sm:$0xff]
        %v1322 = vld [vmem:[%s298 + $0x1d8] sm:$0xff]
        %v1323 = vld [vmem:[%s298 + $0x1e0] sm:$0xff]
        %v1324 = vld [vmem:[%s298 + $0x1e8] sm:$0xff]
        %v1325 = vld [vmem:[%s298 + $0x1f0] sm:$0xff]
        %v1326 = vld [vmem:[%s298 + $0x1f8] sm:$0xff]
        %1327 = vadd.xlane.f32.xlu0 %v1263
        %v1328 = vpop.xlane.xlu0 %1327
        %1329 = vadd.xlane.f32.xlu0 %v1264
        %v1330 = vpop.xlane.xlu0 %1329
        %1331 = vadd.xlane.f32.xlu0 %v1265
        %v1332 = vpop.xlane.xlu0 %1331
        %1333 = vadd.xlane.f32.xlu0 %v1266
        %v1334 = vpop.xlane.xlu0 %1333
        %1335 = vadd.xlane.f32.xlu0 %v1267
        %v1336 = vpop.xlane.xlu0 %1335
        %1337 = vadd.xlane.f32.xlu0 %v1268
        %v1338 = vpop.xlane.xlu0 %1337
        %1339 = vadd.xlane.f32.xlu0 %v1269
        %v1340 = vpop.xlane.xlu0 %1339
        %1341 = vadd.xlane.f32.xlu0 %v1270
        %v1342 = vpop.xlane.xlu0 %1341
        %1343 = vadd.xlane.f32.xlu0 %v1271
        %v1344 = vpop.xlane.xlu0 %1343
        %1345 = vadd.xlane.f32.xlu0 %v1272
        %v1346 = vpop.xlane.xlu0 %1345
        %1347 = vadd.xlane.f32.xlu0 %v1273
        %v1348 = vpop.xlane.xlu0 %1347
        %1349 = vadd.xlane.f32.xlu0 %v1274
        %v1350 = vpop.xlane.xlu0 %1349
        %1351 = vadd.xlane.f32.xlu0 %v1275
        %v1352 = vpop.xlane.xlu0 %1351
        %1353 = vadd.xlane.f32.xlu0 %v1276
        %v1354 = vpop.xlane.xlu0 %1353
        %1355 = vadd.xlane.f32.xlu0 %v1277
        %v1356 = vpop.xlane.xlu0 %1355
        %1357 = vadd.xlane.f32.xlu0 %v1278
        %v1358 = vpop.xlane.xlu0 %1357
        %1359 = vadd.xlane.f32.xlu0 %v1279
        %v1360 = vpop.xlane.xlu0 %1359
        %1361 = vadd.xlane.f32.xlu0 %v1280
        %v1362 = vpop.xlane.xlu0 %1361
        %1363 = vadd.xlane.f32.xlu0 %v1281
        %v1364 = vpop.xlane.xlu0 %1363
        %1365 = vadd.xlane.f32.xlu0 %v1282
        %v1366 = vpop.xlane.xlu0 %1365
        %1367 = vadd.xlane.f32.xlu0 %v1283
        %v1368 = vpop.xlane.xlu0 %1367
        %1369 = vadd.xlane.f32.xlu0 %v1284
        %v1370 = vpop.xlane.xlu0 %1369
        %1371 = vadd.xlane.f32.xlu0 %v1285
        %v1372 = vpop.xlane.xlu0 %1371
        %1373 = vadd.xlane.f32.xlu0 %v1286
        %v1374 = vpop.xlane.xlu0 %1373
        %1375 = vadd.xlane.f32.xlu0 %v1287
        %v1376 = vpop.xlane.xlu0 %1375
        %1377 = vadd.xlane.f32.xlu0 %v1288
        %v1378 = vpop.xlane.xlu0 %1377
        %1379 = vadd.xlane.f32.xlu0 %v1289
        %v1380 = vpop.xlane.xlu0 %1379
        %1381 = vadd.xlane.f32.xlu0 %v1290
        %v1382 = vpop.xlane.xlu0 %1381
        %1383 = vadd.xlane.f32.xlu0 %v1291
        %v1384 = vpop.xlane.xlu0 %1383
        %1385 = vadd.xlane.f32.xlu0 %v1292
        %v1386 = vpop.xlane.xlu0 %1385
        %1387 = vadd.xlane.f32.xlu0 %v1293
        %v1388 = vpop.xlane.xlu0 %1387
        %1389 = vadd.xlane.f32.xlu0 %v1294
        %v1390 = vpop.xlane.xlu0 %1389
        %1391 = vadd.xlane.f32.xlu0 %v1295
        %v1392 = vpop.xlane.xlu0 %1391
        %1393 = vadd.xlane.f32.xlu0 %v1296
        %v1394 = vpop.xlane.xlu0 %1393
        %1395 = vadd.xlane.f32.xlu0 %v1297
        %v1396 = vpop.xlane.xlu0 %1395
        %1397 = vadd.xlane.f32.xlu0 %v1298
        %v1398 = vpop.xlane.xlu0 %1397
        %1399 = vadd.xlane.f32.xlu0 %v1299
        %v1400 = vpop.xlane.xlu0 %1399
        %1401 = vadd.xlane.f32.xlu0 %v1300
        %v1402 = vpop.xlane.xlu0 %1401
        %1403 = vadd.xlane.f32.xlu0 %v1301
        %v1404 = vpop.xlane.xlu0 %1403
        %1405 = vadd.xlane.f32.xlu0 %v1302
        %v1406 = vpop.xlane.xlu0 %1405
        %1407 = vadd.xlane.f32.xlu0 %v1303
        %v1408 = vpop.xlane.xlu0 %1407
        %1409 = vadd.xlane.f32.xlu0 %v1304
        %v1410 = vpop.xlane.xlu0 %1409
        %1411 = vadd.xlane.f32.xlu0 %v1305
        %v1412 = vpop.xlane.xlu0 %1411
        %1413 = vadd.xlane.f32.xlu0 %v1306
        %v1414 = vpop.xlane.xlu0 %1413
        %1415 = vadd.xlane.f32.xlu0 %v1307
        %v1416 = vpop.xlane.xlu0 %1415
        %1417 = vadd.xlane.f32.xlu0 %v1308
        %v1418 = vpop.xlane.xlu0 %1417
        %1419 = vadd.xlane.f32.xlu0 %v1309
        %v1420 = vpop.xlane.xlu0 %1419
        %1421 = vadd.xlane.f32.xlu0 %v1310
        %v1422 = vpop.xlane.xlu0 %1421
        %1423 = vadd.xlane.f32.xlu0 %v1311
        %v1424 = vpop.xlane.xlu0 %1423
        %1425 = vadd.xlane.f32.xlu0 %v1312
        %v1426 = vpop.xlane.xlu0 %1425
        %1427 = vadd.xlane.f32.xlu0 %v1313
        %v1428 = vpop.xlane.xlu0 %1427
        %1429 = vadd.xlane.f32.xlu0 %v1314
        %v1430 = vpop.xlane.xlu0 %1429
        %1431 = vadd.xlane.f32.xlu0 %v1315
        %v1432 = vpop.xlane.xlu0 %1431
        %1433 = vadd.xlane.f32.xlu0 %v1316
        %v1434 = vpop.xlane.xlu0 %1433
        %1435 = vadd.xlane.f32.xlu0 %v1317
        %v1436 = vpop.xlane.xlu0 %1435
        %1437 = vadd.xlane.f32.xlu0 %v1318
        %v1438 = vpop.xlane.xlu0 %1437
        %1439 = vadd.xlane.f32.xlu0 %v1319
        %v1440 = vpop.xlane.xlu0 %1439
        %1441 = vadd.xlane.f32.xlu0 %v1320
        %v1442 = vpop.xlane.xlu0 %1441
        %1443 = vadd.xlane.f32.xlu0 %v1321
        %v1444 = vpop.xlane.xlu0 %1443
        %1445 = vadd.xlane.f32.xlu0 %v1322
        %v1446 = vpop.xlane.xlu0 %1445
        %1447 = vadd.xlane.f32.xlu0 %v1323
        %v1448 = vpop.xlane.xlu0 %1447
        %1449 = vadd.xlane.f32.xlu0 %v1324
        %v1450 = vpop.xlane.xlu0 %1449
        %1451 = vadd.xlane.f32.xlu0 %v1325
        %v1452 = vpop.xlane.xlu0 %1451
        %1453 = vadd.xlane.f32.xlu0 %v1326
        %v1454 = vpop.xlane.xlu0 %1453
        %v1455 = vmul.f32 %v1328, %v546
        %v1456 = vmul.f32 %v1330, %v546
        %v1457 = vmul.f32 %v1332, %v546
        %v1458 = vmul.f32 %v1334, %v546
        %v1459 = vmul.f32 %v1336, %v546
        %v1460 = vmul.f32 %v1338, %v546
        %v1461 = vmul.f32 %v1340, %v546
        %v1462 = vmul.f32 %v1342, %v546
        %v1463 = vmul.f32 %v1344, %v546
        %v1464 = vmul.f32 %v1346, %v546
        %v1465 = vmul.f32 %v1348, %v546
        %v1466 = vmul.f32 %v1350, %v546
        %v1467 = vmul.f32 %v1352, %v546
        %v1468 = vmul.f32 %v1354, %v546
        %v1469 = vmul.f32 %v1356, %v546
        %v1470 = vmul.f32 %v1358, %v546
        %v1471 = vmul.f32 %v1360, %v546
        %v1472 = vmul.f32 %v1362, %v546
        %v1473 = vmul.f32 %v1364, %v546
        %v1474 = vmul.f32 %v1366, %v546
        %v1475 = vmul.f32 %v1368, %v546
        %v1476 = vmul.f32 %v1370, %v546
        %v1477 = vmul.f32 %v1372, %v546
        %v1478 = vmul.f32 %v1374, %v546
        %v1479 = vmul.f32 %v1376, %v546
        %v1480 = vmul.f32 %v1378, %v546
        %v1481 = vmul.f32 %v1380, %v546
        %v1482 = vmul.f32 %v1382, %v546
        %v1483 = vmul.f32 %v1384, %v546
        %v1484 = vmul.f32 %v1386, %v546
        %v1485 = vmul.f32 %v1388, %v546
        %v1486 = vmul.f32 %v1390, %v546
        %v1487 = vmul.f32 %v1392, %v546
        %v1488 = vmul.f32 %v1394, %v546
        %v1489 = vmul.f32 %v1396, %v546
        %v1490 = vmul.f32 %v1398, %v546
        %v1491 = vmul.f32 %v1400, %v546
        %v1492 = vmul.f32 %v1402, %v546
        %v1493 = vmul.f32 %v1404, %v546
        %v1494 = vmul.f32 %v1406, %v546
        %v1495 = vmul.f32 %v1408, %v546
        %v1496 = vmul.f32 %v1410, %v546
        %v1497 = vmul.f32 %v1412, %v546
        %v1498 = vmul.f32 %v1414, %v546
        %v1499 = vmul.f32 %v1416, %v546
        %v1500 = vmul.f32 %v1418, %v546
        %v1501 = vmul.f32 %v1420, %v546
        %v1502 = vmul.f32 %v1422, %v546
        %v1503 = vmul.f32 %v1424, %v546
        %v1504 = vmul.f32 %v1426, %v546
        %v1505 = vmul.f32 %v1428, %v546
        %v1506 = vmul.f32 %v1430, %v546
        %v1507 = vmul.f32 %v1432, %v546
        %v1508 = vmul.f32 %v1434, %v546
        %v1509 = vmul.f32 %v1436, %v546
        %v1510 = vmul.f32 %v1438, %v546
        %v1511 = vmul.f32 %v1440, %v546
        %v1512 = vmul.f32 %v1442, %v546
        %v1513 = vmul.f32 %v1444, %v546
        %v1514 = vmul.f32 %v1446, %v546
        %v1515 = vmul.f32 %v1448, %v546
        %v1516 = vmul.f32 %v1450, %v546
        %v1517 = vmul.f32 %v1452, %v546
        %v1518 = vmul.f32 %v1454, %v546
        %v1519 = vsub.f32 %v1263, %v1455
        %v1520 = vsub.f32 %v1264, %v1456
        %v1521 = vsub.f32 %v1265, %v1457
        %v1522 = vsub.f32 %v1266, %v1458
        %v1523 = vsub.f32 %v1267, %v1459
        %v1524 = vsub.f32 %v1268, %v1460
        %v1525 = vsub.f32 %v1269, %v1461
        %v1526 = vsub.f32 %v1270, %v1462
        %v1527 = vsub.f32 %v1271, %v1463
        %v1528 = vsub.f32 %v1272, %v1464
        %v1529 = vsub.f32 %v1273, %v1465
        %v1530 = vsub.f32 %v1274, %v1466
        %v1531 = vsub.f32 %v1275, %v1467
        %v1532 = vsub.f32 %v1276, %v1468
        %v1533 = vsub.f32 %v1277, %v1469
        %v1534 = vsub.f32 %v1278, %v1470
        %v1535 = vsub.f32 %v1279, %v1471
        %v1536 = vsub.f32 %v1280, %v1472
        %v1537 = vsub.f32 %v1281, %v1473
        %v1538 = vsub.f32 %v1282, %v1474
        %v1539 = vsub.f32 %v1283, %v1475
        %v1540 = vsub.f32 %v1284, %v1476
        %v1541 = vsub.f32 %v1285, %v1477
        %v1542 = vsub.f32 %v1286, %v1478
        %v1543 = vsub.f32 %v1287, %v1479
        %v1544 = vsub.f32 %v1288, %v1480
        %v1545 = vsub.f32 %v1289, %v1481
        %v1546 = vsub.f32 %v1290, %v1482
        %v1547 = vsub.f32 %v1291, %v1483
        %v1548 = vsub.f32 %v1292, %v1484
        %v1549 = vsub.f32 %v1293, %v1485
        %v1550 = vsub.f32 %v1294, %v1486
        %v1551 = vsub.f32 %v1295, %v1487
        %v1552 = vsub.f32 %v1296, %v1488
        %v1553 = vsub.f32 %v1297, %v1489
        %v1554 = vsub.f32 %v1298, %v1490
        %v1555 = vsub.f32 %v1299, %v1491
        %v1556 = vsub.f32 %v1300, %v1492
        %v1557 = vsub.f32 %v1301, %v1493
        %v1558 = vsub.f32 %v1302, %v1494
        %v1559 = vsub.f32 %v1303, %v1495
        %v1560 = vsub.f32 %v1304, %v1496
        %v1561 = vsub.f32 %v1305, %v1497
        %v1562 = vsub.f32 %v1306, %v1498
        %v1563 = vsub.f32 %v1307, %v1499
        %v1564 = vsub.f32 %v1308, %v1500
        %v1565 = vsub.f32 %v1309, %v1501
        %v1566 = vsub.f32 %v1310, %v1502
        %v1567 = vsub.f32 %v1311, %v1503
        %v1568 = vsub.f32 %v1312, %v1504
        %v1569 = vsub.f32 %v1313, %v1505
        %v1570 = vsub.f32 %v1314, %v1506
        %v1571 = vsub.f32 %v1315, %v1507
        %v1572 = vsub.f32 %v1316, %v1508
        %v1573 = vsub.f32 %v1317, %v1509
        %v1574 = vsub.f32 %v1318, %v1510
        %v1575 = vsub.f32 %v1319, %v1511
        %v1576 = vsub.f32 %v1320, %v1512
        %v1577 = vsub.f32 %v1321, %v1513
        %v1578 = vsub.f32 %v1322, %v1514
        %v1579 = vsub.f32 %v1323, %v1515
        %v1580 = vsub.f32 %v1324, %v1516
        %v1581 = vsub.f32 %v1325, %v1517
        %v1582 = vsub.f32 %v1326, %v1518
        %v1583 = vmul.f32 %v1519, %v1519
        %v1584 = vmul.f32 %v1520, %v1520
        %v1585 = vmul.f32 %v1521, %v1521
        %v1586 = vmul.f32 %v1522, %v1522
        %v1587 = vmul.f32 %v1523, %v1523
        %v1588 = vmul.f32 %v1524, %v1524
        %v1589 = vmul.f32 %v1525, %v1525
        %v1590 = vmul.f32 %v1526, %v1526
        %v1591 = vmul.f32 %v1527, %v1527
        %v1592 = vmul.f32 %v1528, %v1528
        %v1593 = vmul.f32 %v1529, %v1529
        %v1594 = vmul.f32 %v1530, %v1530
        %v1595 = vmul.f32 %v1531, %v1531
        %v1596 = vmul.f32 %v1532, %v1532
        %v1597 = vmul.f32 %v1533, %v1533
        %v1598 = vmul.f32 %v1534, %v1534
        %v1599 = vmul.f32 %v1535, %v1535
        %v1600 = vmul.f32 %v1536, %v1536
        %v1601 = vmul.f32 %v1537, %v1537
        %v1602 = vmul.f32 %v1538, %v1538
        %v1603 = vmul.f32 %v1539, %v1539
        %v1604 = vmul.f32 %v1540, %v1540
        %v1605 = vmul.f32 %v1541, %v1541
        %v1606 = vmul.f32 %v1542, %v1542
        %v1607 = vmul.f32 %v1543, %v1543
        %v1608 = vmul.f32 %v1544, %v1544
        %v1609 = vmul.f32 %v1545, %v1545
        %v1610 = vmul.f32 %v1546, %v1546
        %v1611 = vmul.f32 %v1547, %v1547
        %v1612 = vmul.f32 %v1548, %v1548
        %v1613 = vmul.f32 %v1549, %v1549
        %v1614 = vmul.f32 %v1550, %v1550
        %v1615 = vmul.f32 %v1551, %v1551
        %v1616 = vmul.f32 %v1552, %v1552
        %v1617 = vmul.f32 %v1553, %v1553
        %v1618 = vmul.f32 %v1554, %v1554
        %v1619 = vmul.f32 %v1555, %v1555
        %v1620 = vmul.f32 %v1556, %v1556
        %v1621 = vmul.f32 %v1557, %v1557
        %v1622 = vmul.f32 %v1558, %v1558
        %v1623 = vmul.f32 %v1559, %v1559
        %v1624 = vmul.f32 %v1560, %v1560
        %v1625 = vmul.f32 %v1561, %v1561
        %v1626 = vmul.f32 %v1562, %v1562
        %v1627 = vmul.f32 %v1563, %v1563
        %v1628 = vmul.f32 %v1564, %v1564
        %v1629 = vmul.f32 %v1565, %v1565
        %v1630 = vmul.f32 %v1566, %v1566
        %v1631 = vmul.f32 %v1567, %v1567
        %v1632 = vmul.f32 %v1568, %v1568
        %v1633 = vmul.f32 %v1569, %v1569
        %v1634 = vmul.f32 %v1570, %v1570
        %v1635 = vmul.f32 %v1571, %v1571
        %v1636 = vmul.f32 %v1572, %v1572
        %v1637 = vmul.f32 %v1573, %v1573
        %v1638 = vmul.f32 %v1574, %v1574
        %v1639 = vmul.f32 %v1575, %v1575
        %v1640 = vmul.f32 %v1576, %v1576
        %v1641 = vmul.f32 %v1577, %v1577
        %v1642 = vmul.f32 %v1578, %v1578
        %v1643 = vmul.f32 %v1579, %v1579
        %v1644 = vmul.f32 %v1580, %v1580
        %v1645 = vmul.f32 %v1581, %v1581
        %v1646 = vmul.f32 %v1582, %v1582
        %1647 = vadd.xlane.f32.xlu0 %v1583
        %v1648 = vpop.xlane.xlu0 %1647
        %1649 = vadd.xlane.f32.xlu0 %v1584
        %v1650 = vpop.xlane.xlu0 %1649
        %1651 = vadd.xlane.f32.xlu0 %v1585
        %v1652 = vpop.xlane.xlu0 %1651
        %1653 = vadd.xlane.f32.xlu0 %v1586
        %v1654 = vpop.xlane.xlu0 %1653
        %1655 = vadd.xlane.f32.xlu0 %v1587
        %v1656 = vpop.xlane.xlu0 %1655
        %1657 = vadd.xlane.f32.xlu0 %v1588
        %v1658 = vpop.xlane.xlu0 %1657
        %1659 = vadd.xlane.f32.xlu0 %v1589
        %v1660 = vpop.xlane.xlu0 %1659
        %1661 = vadd.xlane.f32.xlu0 %v1590
        %v1662 = vpop.xlane.xlu0 %1661
        %1663 = vadd.xlane.f32.xlu0 %v1591
        %v1664 = vpop.xlane.xlu0 %1663
        %1665 = vadd.xlane.f32.xlu0 %v1592
        %v1666 = vpop.xlane.xlu0 %1665
        %1667 = vadd.xlane.f32.xlu0 %v1593
        %v1668 = vpop.xlane.xlu0 %1667
        %1669 = vadd.xlane.f32.xlu0 %v1594
        %v1670 = vpop.xlane.xlu0 %1669
        %1671 = vadd.xlane.f32.xlu0 %v1595
        %v1672 = vpop.xlane.xlu0 %1671
        %1673 = vadd.xlane.f32.xlu0 %v1596
        %v1674 = vpop.xlane.xlu0 %1673
        %1675 = vadd.xlane.f32.xlu0 %v1597
        %v1676 = vpop.xlane.xlu0 %1675
        %1677 = vadd.xlane.f32.xlu0 %v1598
        %v1678 = vpop.xlane.xlu0 %1677
        %1679 = vadd.xlane.f32.xlu0 %v1599
        %v1680 = vpop.xlane.xlu0 %1679
        %1681 = vadd.xlane.f32.xlu0 %v1600
        %v1682 = vpop.xlane.xlu0 %1681
        %1683 = vadd.xlane.f32.xlu0 %v1601
        %v1684 = vpop.xlane.xlu0 %1683
        %1685 = vadd.xlane.f32.xlu0 %v1602
        %v1686 = vpop.xlane.xlu0 %1685
        %1687 = vadd.xlane.f32.xlu0 %v1603
        %v1688 = vpop.xlane.xlu0 %1687
        %1689 = vadd.xlane.f32.xlu0 %v1604
        %v1690 = vpop.xlane.xlu0 %1689
        %1691 = vadd.xlane.f32.xlu0 %v1605
        %v1692 = vpop.xlane.xlu0 %1691
        %1693 = vadd.xlane.f32.xlu0 %v1606
        %v1694 = vpop.xlane.xlu0 %1693
        %1695 = vadd.xlane.f32.xlu0 %v1607
        %v1696 = vpop.xlane.xlu0 %1695
        %1697 = vadd.xlane.f32.xlu0 %v1608
        %v1698 = vpop.xlane.xlu0 %1697
        %1699 = vadd.xlane.f32.xlu0 %v1609
        %v1700 = vpop.xlane.xlu0 %1699
        %1701 = vadd.xlane.f32.xlu0 %v1610
        %v1702 = vpop.xlane.xlu0 %1701
        %1703 = vadd.xlane.f32.xlu0 %v1611
        %v1704 = vpop.xlane.xlu0 %1703
        %1705 = vadd.xlane.f32.xlu0 %v1612
        %v1706 = vpop.xlane.xlu0 %1705
        %1707 = vadd.xlane.f32.xlu0 %v1613
        %v1708 = vpop.xlane.xlu0 %1707
        %1709 = vadd.xlane.f32.xlu0 %v1614
        %v1710 = vpop.xlane.xlu0 %1709
        %1711 = vadd.xlane.f32.xlu0 %v1615
        %v1712 = vpop.xlane.xlu0 %1711
        %1713 = vadd.xlane.f32.xlu0 %v1616
        %v1714 = vpop.xlane.xlu0 %1713
        %1715 = vadd.xlane.f32.xlu0 %v1617
        %v1716 = vpop.xlane.xlu0 %1715
        %1717 = vadd.xlane.f32.xlu0 %v1618
        %v1718 = vpop.xlane.xlu0 %1717
        %1719 = vadd.xlane.f32.xlu0 %v1619
        %v1720 = vpop.xlane.xlu0 %1719
        %1721 = vadd.xlane.f32.xlu0 %v1620
        %v1722 = vpop.xlane.xlu0 %1721
        %1723 = vadd.xlane.f32.xlu0 %v1621
        %v1724 = vpop.xlane.xlu0 %1723
        %1725 = vadd.xlane.f32.xlu0 %v1622
        %v1726 = vpop.xlane.xlu0 %1725
        %1727 = vadd.xlane.f32.xlu0 %v1623
        %v1728 = vpop.xlane.xlu0 %1727
        %1729 = vadd.xlane.f32.xlu0 %v1624
        %v1730 = vpop.xlane.xlu0 %1729
        %1731 = vadd.xlane.f32.xlu0 %v1625
        %v1732 = vpop.xlane.xlu0 %1731
        %1733 = vadd.xlane.f32.xlu0 %v1626
        %v1734 = vpop.xlane.xlu0 %1733
        %1735 = vadd.xlane.f32.xlu0 %v1627
        %v1736 = vpop.xlane.xlu0 %1735
        %1737 = vadd.xlane.f32.xlu0 %v1628
        %v1738 = vpop.xlane.xlu0 %1737
        %1739 = vadd.xlane.f32.xlu0 %v1629
        %v1740 = vpop.xlane.xlu0 %1739
        %1741 = vadd.xlane.f32.xlu0 %v1630
        %v1742 = vpop.xlane.xlu0 %1741
        %1743 = vadd.xlane.f32.xlu0 %v1631
        %v1744 = vpop.xlane.xlu0 %1743
        %1745 = vadd.xlane.f32.xlu0 %v1632
        %v1746 = vpop.xlane.xlu0 %1745
        %1747 = vadd.xlane.f32.xlu0 %v1633
        %v1748 = vpop.xlane.xlu0 %1747
        %1749 = vadd.xlane.f32.xlu0 %v1634
        %v1750 = vpop.xlane.xlu0 %1749
        %1751 = vadd.xlane.f32.xlu0 %v1635
        %v1752 = vpop.xlane.xlu0 %1751
        %1753 = vadd.xlane.f32.xlu0 %v1636
        %v1754 = vpop.xlane.xlu0 %1753
        %1755 = vadd.xlane.f32.xlu0 %v1637
        %v1756 = vpop.xlane.xlu0 %1755
        %1757 = vadd.xlane.f32.xlu0 %v1638
        %v1758 = vpop.xlane.xlu0 %1757
        %1759 = vadd.xlane.f32.xlu0 %v1639
        %v1760 = vpop.xlane.xlu0 %1759
        %1761 = vadd.xlane.f32.xlu0 %v1640
        %v1762 = vpop.xlane.xlu0 %1761
        %1763 = vadd.xlane.f32.xlu0 %v1641
        %v1764 = vpop.xlane.xlu0 %1763
        %1765 = vadd.xlane.f32.xlu0 %v1642
        %v1766 = vpop.xlane.xlu0 %1765
        %1767 = vadd.xlane.f32.xlu0 %v1643
        %v1768 = vpop.xlane.xlu0 %1767
        %1769 = vadd.xlane.f32.xlu0 %v1644
        %v1770 = vpop.xlane.xlu0 %1769
        %1771 = vadd.xlane.f32.xlu0 %v1645
        %v1772 = vpop.xlane.xlu0 %1771
        %1773 = vadd.xlane.f32.xlu0 %v1646
        %v1774 = vpop.xlane.xlu0 %1773
        %v1775 = vmul.f32 %v1648, %v546
        %v1776 = vmul.f32 %v1650, %v546
        %v1777 = vmul.f32 %v1652, %v546
        %v1778 = vmul.f32 %v1654, %v546
        %v1779 = vmul.f32 %v1656, %v546
        %v1780 = vmul.f32 %v1658, %v546
        %v1781 = vmul.f32 %v1660, %v546
        %v1782 = vmul.f32 %v1662, %v546
        %v1783 = vmul.f32 %v1664, %v546
        %v1784 = vmul.f32 %v1666, %v546
        %v1785 = vmul.f32 %v1668, %v546
        %v1786 = vmul.f32 %v1670, %v546
        %v1787 = vmul.f32 %v1672, %v546
        %v1788 = vmul.f32 %v1674, %v546
        %v1789 = vmul.f32 %v1676, %v546
        %v1790 = vmul.f32 %v1678, %v546
        %v1791 = vmul.f32 %v1680, %v546
        %v1792 = vmul.f32 %v1682, %v546
        %v1793 = vmul.f32 %v1684, %v546
        %v1794 = vmul.f32 %v1686, %v546
        %v1795 = vmul.f32 %v1688, %v546
        %v1796 = vmul.f32 %v1690, %v546
        %v1797 = vmul.f32 %v1692, %v546
        %v1798 = vmul.f32 %v1694, %v546
        %v1799 = vmul.f32 %v1696, %v546
        %v1800 = vmul.f32 %v1698, %v546
        %v1801 = vmul.f32 %v1700, %v546
        %v1802 = vmul.f32 %v1702, %v546
        %v1803 = vmul.f32 %v1704, %v546
        %v1804 = vmul.f32 %v1706, %v546
        %v1805 = vmul.f32 %v1708, %v546
        %v1806 = vmul.f32 %v1710, %v546
        %v1807 = vmul.f32 %v1712, %v546
        %v1808 = vmul.f32 %v1714, %v546
        %v1809 = vmul.f32 %v1716, %v546
        %v1810 = vmul.f32 %v1718, %v546
        %v1811 = vmul.f32 %v1720, %v546
        %v1812 = vmul.f32 %v1722, %v546
        %v1813 = vmul.f32 %v1724, %v546
        %v1814 = vmul.f32 %v1726, %v546
        %v1815 = vmul.f32 %v1728, %v546
        %v1816 = vmul.f32 %v1730, %v546
        %v1817 = vmul.f32 %v1732, %v546
        %v1818 = vmul.f32 %v1734, %v546
        %v1819 = vmul.f32 %v1736, %v546
        %v1820 = vmul.f32 %v1738, %v546
        %v1821 = vmul.f32 %v1740, %v546
        %v1822 = vmul.f32 %v1742, %v546
        %v1823 = vmul.f32 %v1744, %v546
        %v1824 = vmul.f32 %v1746, %v546
        %v1825 = vmul.f32 %v1748, %v546
        %v1826 = vmul.f32 %v1750, %v546
        %v1827 = vmul.f32 %v1752, %v546
        %v1828 = vmul.f32 %v1754, %v546
        %v1829 = vmul.f32 %v1756, %v546
        %v1830 = vmul.f32 %v1758, %v546
        %v1831 = vmul.f32 %v1760, %v546
        %v1832 = vmul.f32 %v1762, %v546
        %v1833 = vmul.f32 %v1764, %v546
        %v1834 = vmul.f32 %v1766, %v546
        %v1835 = vmul.f32 %v1768, %v546
        %v1836 = vmul.f32 %v1770, %v546
        %v1837 = vmul.f32 %v1772, %v546
        %v1838 = vmul.f32 %v1774, %v546
        %v1839 = vadd.f32 %v1775, 1e-05
        %v1840 = vadd.f32 %v1776, 1e-05
        %v1841 = vadd.f32 %v1777, 1e-05
        %v1842 = vadd.f32 %v1778, 1e-05
        %v1843 = vadd.f32 %v1779, 1e-05
        %v1844 = vadd.f32 %v1780, 1e-05
        %v1845 = vadd.f32 %v1781, 1e-05
        %v1846 = vadd.f32 %v1782, 1e-05
        %v1847 = vadd.f32 %v1783, 1e-05
        %v1848 = vadd.f32 %v1784, 1e-05
        %v1849 = vadd.f32 %v1785, 1e-05
        %v1850 = vadd.f32 %v1786, 1e-05
        %v1851 = vadd.f32 %v1787, 1e-05
        %v1852 = vadd.f32 %v1788, 1e-05
        %v1853 = vadd.f32 %v1789, 1e-05
        %v1854 = vadd.f32 %v1790, 1e-05
        %v1855 = vadd.f32 %v1791, 1e-05
        %v1856 = vadd.f32 %v1792, 1e-05
        %v1857 = vadd.f32 %v1793, 1e-05
        %v1858 = vadd.f32 %v1794, 1e-05
        %v1859 = vadd.f32 %v1795, 1e-05
        %v1860 = vadd.f32 %v1796, 1e-05
        %v1861 = vadd.f32 %v1797, 1e-05
        %v1862 = vadd.f32 %v1798, 1e-05
        %v1863 = vadd.f32 %v1799, 1e-05
        %v1864 = vadd.f32 %v1800, 1e-05
        %v1865 = vadd.f32 %v1801, 1e-05
        %v1866 = vadd.f32 %v1802, 1e-05
        %v1867 = vadd.f32 %v1803, 1e-05
        %v1868 = vadd.f32 %v1804, 1e-05
        %v1869 = vadd.f32 %v1805, 1e-05
        %v1870 = vadd.f32 %v1806, 1e-05
        %v1871 = vadd.f32 %v1807, 1e-05
        %v1872 = vadd.f32 %v1808, 1e-05
        %v1873 = vadd.f32 %v1809, 1e-05
        %v1874 = vadd.f32 %v1810, 1e-05
        %v1875 = vadd.f32 %v1811, 1e-05
        %v1876 = vadd.f32 %v1812, 1e-05
        %v1877 = vadd.f32 %v1813, 1e-05
        %v1878 = vadd.f32 %v1814, 1e-05
        %v1879 = vadd.f32 %v1815, 1e-05
        %v1880 = vadd.f32 %v1816, 1e-05
        %v1881 = vadd.f32 %v1817, 1e-05
        %v1882 = vadd.f32 %v1818, 1e-05
        %v1883 = vadd.f32 %v1819, 1e-05
        %v1884 = vadd.f32 %v1820, 1e-05
        %v1885 = vadd.f32 %v1821, 1e-05
        %v1886 = vadd.f32 %v1822, 1e-05
        %v1887 = vadd.f32 %v1823, 1e-05
        %v1888 = vadd.f32 %v1824, 1e-05
        %v1889 = vadd.f32 %v1825, 1e-05
        %v1890 = vadd.f32 %v1826, 1e-05
        %v1891 = vadd.f32 %v1827, 1e-05
        %v1892 = vadd.f32 %v1828, 1e-05
        %v1893 = vadd.f32 %v1829, 1e-05
        %v1894 = vadd.f32 %v1830, 1e-05
        %v1895 = vadd.f32 %v1831, 1e-05
        %v1896 = vadd.f32 %v1832, 1e-05
        %v1897 = vadd.f32 %v1833, 1e-05
        %v1898 = vadd.f32 %v1834, 1e-05
        %v1899 = vadd.f32 %v1835, 1e-05
        %v1900 = vadd.f32 %v1836, 1e-05
        %v1901 = vadd.f32 %v1837, 1e-05
        %v1902 = vadd.f32 %v1838, 1e-05
        %v1903 = vrsqrt.pop %v1839
        %v1904 = vrsqrt.pop %v1840
        %v1905 = vrsqrt.pop %v1841
        %v1906 = vrsqrt.pop %v1842
        %v1907 = vrsqrt.pop %v1843
        %v1908 = vrsqrt.pop %v1844
        %v1909 = vrsqrt.pop %v1845
        %v1910 = vrsqrt.pop %v1846
        %v1911 = vrsqrt.pop %v1847
        %v1912 = vrsqrt.pop %v1848
        %v1913 = vrsqrt.pop %v1849
        %v1914 = vrsqrt.pop %v1850
        %v1915 = vrsqrt.pop %v1851
        %v1916 = vrsqrt.pop %v1852
        %v1917 = vrsqrt.pop %v1853
        %v1918 = vrsqrt.pop %v1854
        %v1919 = vrsqrt.pop %v1855
        %v1920 = vrsqrt.pop %v1856
        %v1921 = vrsqrt.pop %v1857
        %v1922 = vrsqrt.pop %v1858
        %v1923 = vrsqrt.pop %v1859
        %v1924 = vrsqrt.pop %v1860
        %v1925 = vrsqrt.pop %v1861
        %v1926 = vrsqrt.pop %v1862
        %v1927 = vrsqrt.pop %v1863
        %v1928 = vrsqrt.pop %v1864
        %v1929 = vrsqrt.pop %v1865
        %v1930 = vrsqrt.pop %v1866
        %v1931 = vrsqrt.pop %v1867
        %v1932 = vrsqrt.pop %v1868
        %v1933 = vrsqrt.pop %v1869
        %v1934 = vrsqrt.pop %v1870
        %v1935 = vrsqrt.pop %v1871
        %v1936 = vrsqrt.pop %v1872
        %v1937 = vrsqrt.pop %v1873
        %v1938 = vrsqrt.pop %v1874
        %v1939 = vrsqrt.pop %v1875
        %v1940 = vrsqrt.pop %v1876
        %v1941 = vrsqrt.pop %v1877
        %v1942 = vrsqrt.pop %v1878
        %v1943 = vrsqrt.pop %v1879
        %v1944 = vrsqrt.pop %v1880
        %v1945 = vrsqrt.pop %v1881
        %v1946 = vrsqrt.pop %v1882
        %v1947 = vrsqrt.pop %v1883
        %v1948 = vrsqrt.pop %v1884
        %v1949 = vrsqrt.pop %v1885
        %v1950 = vrsqrt.pop %v1886
        %v1951 = vrsqrt.pop %v1887
        %v1952 = vrsqrt.pop %v1888
        %v1953 = vrsqrt.pop %v1889
        %v1954 = vrsqrt.pop %v1890
        %v1955 = vrsqrt.pop %v1891
        %v1956 = vrsqrt.pop %v1892
        %v1957 = vrsqrt.pop %v1893
        %v1958 = vrsqrt.pop %v1894
        %v1959 = vrsqrt.pop %v1895
        %v1960 = vrsqrt.pop %v1896
        %v1961 = vrsqrt.pop %v1897
        %v1962 = vrsqrt.pop %v1898
        %v1963 = vrsqrt.pop %v1899
        %v1964 = vrsqrt.pop %v1900
        %v1965 = vrsqrt.pop %v1901
        %v1966 = vrsqrt.pop %v1902
        %v1967 = vmul.f32 %v1903, %v1063
        %v1968 = vmul.f32 %v1904, %v1063
        %v1969 = vmul.f32 %v1905, %v1063
        %v1970 = vmul.f32 %v1906, %v1063
        %v1971 = vmul.f32 %v1907, %v1063
        %v1972 = vmul.f32 %v1908, %v1063
        %v1973 = vmul.f32 %v1909, %v1063
        %v1974 = vmul.f32 %v1910, %v1063
        %v1975 = vmul.f32 %v1911, %v1063
        %v1976 = vmul.f32 %v1912, %v1063
        %v1977 = vmul.f32 %v1913, %v1063
        %v1978 = vmul.f32 %v1914, %v1063
        %v1979 = vmul.f32 %v1915, %v1063
        %v1980 = vmul.f32 %v1916, %v1063
        %v1981 = vmul.f32 %v1917, %v1063
        %v1982 = vmul.f32 %v1918, %v1063
        %v1983 = vmul.f32 %v1919, %v1063
        %v1984 = vmul.f32 %v1920, %v1063
        %v1985 = vmul.f32 %v1921, %v1063
        %v1986 = vmul.f32 %v1922, %v1063
        %v1987 = vmul.f32 %v1923, %v1063
        %v1988 = vmul.f32 %v1924, %v1063
        %v1989 = vmul.f32 %v1925, %v1063
        %v1990 = vmul.f32 %v1926, %v1063
        %v1991 = vmul.f32 %v1927, %v1063
        %v1992 = vmul.f32 %v1928, %v1063
        %v1993 = vmul.f32 %v1929, %v1063
        %v1994 = vmul.f32 %v1930, %v1063
        %v1995 = vmul.f32 %v1931, %v1063
        %v1996 = vmul.f32 %v1932, %v1063
        %v1997 = vmul.f32 %v1933, %v1063
        %v1998 = vmul.f32 %v1934, %v1063
        %v1999 = vmul.f32 %v1935, %v1063
        %v2000 = vmul.f32 %v1936, %v1063
        %v2001 = vmul.f32 %v1937, %v1063
        %v2002 = vmul.f32 %v1938, %v1063
        %v2003 = vmul.f32 %v1939, %v1063
        %v2004 = vmul.f32 %v1940, %v1063
        %v2005 = vmul.f32 %v1941, %v1063
        %v2006 = vmul.f32 %v1942, %v1063
        %v2007 = vmul.f32 %v1943, %v1063
        %v2008 = vmul.f32 %v1944, %v1063
        %v2009 = vmul.f32 %v1945, %v1063
        %v2010 = vmul.f32 %v1946, %v1063
        %v2011 = vmul.f32 %v1947, %v1063
        %v2012 = vmul.f32 %v1948, %v1063
        %v2013 = vmul.f32 %v1949, %v1063
        %v2014 = vmul.f32 %v1950, %v1063
        %v2015 = vmul.f32 %v1951, %v1063
        %v2016 = vmul.f32 %v1952, %v1063
        %v2017 = vmul.f32 %v1953, %v1063
        %v2018 = vmul.f32 %v1954, %v1063
        %v2019 = vmul.f32 %v1955, %v1063
        %v2020 = vmul.f32 %v1956, %v1063
        %v2021 = vmul.f32 %v1957, %v1063
        %v2022 = vmul.f32 %v1958, %v1063
        %v2023 = vmul.f32 %v1959, %v1063
        %v2024 = vmul.f32 %v1960, %v1063
        %v2025 = vmul.f32 %v1961, %v1063
        %v2026 = vmul.f32 %v1962, %v1063
        %v2027 = vmul.f32 %v1963, %v1063
        %v2028 = vmul.f32 %v1964, %v1063
        %v2029 = vmul.f32 %v1965, %v1063
        %v2030 = vmul.f32 %v1966, %v1063
        %v2031 = vmul.f32 %v1519, %v1967
        %v2032 = vmul.f32 %v1520, %v1968
        %v2033 = vmul.f32 %v1521, %v1969
        %v2034 = vmul.f32 %v1522, %v1970
        %v2035 = vmul.f32 %v1523, %v1971
        %v2036 = vmul.f32 %v1524, %v1972
        %v2037 = vmul.f32 %v1525, %v1973
        %v2038 = vmul.f32 %v1526, %v1974
        %v2039 = vmul.f32 %v1527, %v1975
        %v2040 = vmul.f32 %v1528, %v1976
        %v2041 = vmul.f32 %v1529, %v1977
        %v2042 = vmul.f32 %v1530, %v1978
        %v2043 = vmul.f32 %v1531, %v1979
        %v2044 = vmul.f32 %v1532, %v1980
        %v2045 = vmul.f32 %v1533, %v1981
        %v2046 = vmul.f32 %v1534, %v1982
        %v2047 = vmul.f32 %v1535, %v1983
        %v2048 = vmul.f32 %v1536, %v1984
        %v2049 = vmul.f32 %v1537, %v1985
        %v2050 = vmul.f32 %v1538, %v1986
        %v2051 = vmul.f32 %v1539, %v1987
        %v2052 = vmul.f32 %v1540, %v1988
        %v2053 = vmul.f32 %v1541, %v1989
        %v2054 = vmul.f32 %v1542, %v1990
        %v2055 = vmul.f32 %v1543, %v1991
        %v2056 = vmul.f32 %v1544, %v1992
        %v2057 = vmul.f32 %v1545, %v1993
        %v2058 = vmul.f32 %v1546, %v1994
        %v2059 = vmul.f32 %v1547, %v1995
        %v2060 = vmul.f32 %v1548, %v1996
        %v2061 = vmul.f32 %v1549, %v1997
        %v2062 = vmul.f32 %v1550, %v1998
        %v2063 = vmul.f32 %v1551, %v1999
        %v2064 = vmul.f32 %v1552, %v2000
        %v2065 = vmul.f32 %v1553, %v2001
        %v2066 = vmul.f32 %v1554, %v2002
        %v2067 = vmul.f32 %v1555, %v2003
        %v2068 = vmul.f32 %v1556, %v2004
        %v2069 = vmul.f32 %v1557, %v2005
        %v2070 = vmul.f32 %v1558, %v2006
        %v2071 = vmul.f32 %v1559, %v2007
        %v2072 = vmul.f32 %v1560, %v2008
        %v2073 = vmul.f32 %v1561, %v2009
        %v2074 = vmul.f32 %v1562, %v2010
        %v2075 = vmul.f32 %v1563, %v2011
        %v2076 = vmul.f32 %v1564, %v2012
        %v2077 = vmul.f32 %v1565, %v2013
        %v2078 = vmul.f32 %v1566, %v2014
        %v2079 = vmul.f32 %v1567, %v2015
        %v2080 = vmul.f32 %v1568, %v2016
        %v2081 = vmul.f32 %v1569, %v2017
        %v2082 = vmul.f32 %v1570, %v2018
        %v2083 = vmul.f32 %v1571, %v2019
        %v2084 = vmul.f32 %v1572, %v2020
        %v2085 = vmul.f32 %v1573, %v2021
        %v2086 = vmul.f32 %v1574, %v2022
        %v2087 = vmul.f32 %v1575, %v2023
        %v2088 = vmul.f32 %v1576, %v2024
        %v2089 = vmul.f32 %v1577, %v2025
        %v2090 = vmul.f32 %v1578, %v2026
        %v2091 = vmul.f32 %v1579, %v2027
        %v2092 = vmul.f32 %v1580, %v2028
        %v2093 = vmul.f32 %v1581, %v2029
        %v2094 = vmul.f32 %v1582, %v2030
        %v2095 = vadd.f32 %v2031, %v1197
        %v2096 = vadd.f32 %v2032, %v1197
        %v2097 = vadd.f32 %v2033, %v1197
        %v2098 = vadd.f32 %v2034, %v1197
        %v2099 = vadd.f32 %v2035, %v1197
        %v2100 = vadd.f32 %v2036, %v1197
        %v2101 = vadd.f32 %v2037, %v1197
        %v2102 = vadd.f32 %v2038, %v1197
        %v2103 = vadd.f32 %v2039, %v1197
        %v2104 = vadd.f32 %v2040, %v1197
        %v2105 = vadd.f32 %v2041, %v1197
        %v2106 = vadd.f32 %v2042, %v1197
        %v2107 = vadd.f32 %v2043, %v1197
        %v2108 = vadd.f32 %v2044, %v1197
        %v2109 = vadd.f32 %v2045, %v1197
        %v2110 = vadd.f32 %v2046, %v1197
        %v2111 = vadd.f32 %v2047, %v1197
        %v2112 = vadd.f32 %v2048, %v1197
        %v2113 = vadd.f32 %v2049, %v1197
        %v2114 = vadd.f32 %v2050, %v1197
        %v2115 = vadd.f32 %v2051, %v1197
        %v2116 = vadd.f32 %v2052, %v1197
        %v2117 = vadd.f32 %v2053, %v1197
        %v2118 = vadd.f32 %v2054, %v1197
        %v2119 = vadd.f32 %v2055, %v1197
        %v2120 = vadd.f32 %v2056, %v1197
        %v2121 = vadd.f32 %v2057, %v1197
        %v2122 = vadd.f32 %v2058, %v1197
        %v2123 = vadd.f32 %v2059, %v1197
        %v2124 = vadd.f32 %v2060, %v1197
        %v2125 = vadd.f32 %v2061, %v1197
        %v2126 = vadd.f32 %v2062, %v1197
        %v2127 = vadd.f32 %v2063, %v1197
        %v2128 = vadd.f32 %v2064, %v1197
        %v2129 = vadd.f32 %v2065, %v1197
        %v2130 = vadd.f32 %v2066, %v1197
        %v2131 = vadd.f32 %v2067, %v1197
        %v2132 = vadd.f32 %v2068, %v1197
        %v2133 = vadd.f32 %v2069, %v1197
        %v2134 = vadd.f32 %v2070, %v1197
        %v2135 = vadd.f32 %v2071, %v1197
        %v2136 = vadd.f32 %v2072, %v1197
        %v2137 = vadd.f32 %v2073, %v1197
        %v2138 = vadd.f32 %v2074, %v1197
        %v2139 = vadd.f32 %v2075, %v1197
        %v2140 = vadd.f32 %v2076, %v1197
        %v2141 = vadd.f32 %v2077, %v1197
        %v2142 = vadd.f32 %v2078, %v1197
        %v2143 = vadd.f32 %v2079, %v1197
        %v2144 = vadd.f32 %v2080, %v1197
        %v2145 = vadd.f32 %v2081, %v1197
        %v2146 = vadd.f32 %v2082, %v1197
        %v2147 = vadd.f32 %v2083, %v1197
        %v2148 = vadd.f32 %v2084, %v1197
        %v2149 = vadd.f32 %v2085, %v1197
        %v2150 = vadd.f32 %v2086, %v1197
        %v2151 = vadd.f32 %v2087, %v1197
        %v2152 = vadd.f32 %v2088, %v1197
        %v2153 = vadd.f32 %v2089, %v1197
        %v2154 = vadd.f32 %v2090, %v1197
        %v2155 = vadd.f32 %v2091, %v1197
        %v2156 = vadd.f32 %v2092, %v1197
        %v2157 = vadd.f32 %v2093, %v1197
        %v2158 = vadd.f32 %v2094, %v1197
        %v2159 = vpack.c.bf16 %v1200, %v1199
        %v2160 = vpack.c.bf16 %v2096, %v2095
        %v2161 = vpack.c.bf16 %v1202, %v1201
        %v2162 = vpack.c.bf16 %v2098, %v2097
        %v2163 = vpack.c.bf16 %v1204, %v1203
        %v2164 = vpack.c.bf16 %v2100, %v2099
        %v2165 = vpack.c.bf16 %v1206, %v1205
        %v2166 = vpack.c.bf16 %v2102, %v2101
        %v2167 = vpack.c.bf16 %v1208, %v1207
        %v2168 = vpack.c.bf16 %v2104, %v2103
        %v2169 = vpack.c.bf16 %v1210, %v1209
        %v2170 = vpack.c.bf16 %v2106, %v2105
        %v2171 = vpack.c.bf16 %v1212, %v1211
        %v2172 = vpack.c.bf16 %v2108, %v2107
        %v2173 = vpack.c.bf16 %v1214, %v1213
        %v2174 = vpack.c.bf16 %v2110, %v2109
        %v2175 = vpack.c.bf16 %v1216, %v1215
        %v2176 = vpack.c.bf16 %v2112, %v2111
        %v2177 = vpack.c.bf16 %v1218, %v1217
        %v2178 = vpack.c.bf16 %v2114, %v2113
        %v2179 = vpack.c.bf16 %v1220, %v1219
        %v2180 = vpack.c.bf16 %v2116, %v2115
        %v2181 = vpack.c.bf16 %v1222, %v1221
        %v2182 = vpack.c.bf16 %v2118, %v2117
        %v2183 = vpack.c.bf16 %v1224, %v1223
        %v2184 = vpack.c.bf16 %v2120, %v2119
        %v2185 = vpack.c.bf16 %v1226, %v1225
        %v2186 = vpack.c.bf16 %v2122, %v2121
        %v2187 = vpack.c.bf16 %v1228, %v1227
        %v2188 = vpack.c.bf16 %v2124, %v2123
        %v2189 = vpack.c.bf16 %v1230, %v1229
        %v2190 = vpack.c.bf16 %v2126, %v2125
        %v2191 = vpack.c.bf16 %v1232, %v1231
        %v2192 = vpack.c.bf16 %v2128, %v2127
        %v2193 = vpack.c.bf16 %v1234, %v1233
        %v2194 = vpack.c.bf16 %v2130, %v2129
        %v2195 = vpack.c.bf16 %v1236, %v1235
        %v2196 = vpack.c.bf16 %v2132, %v2131
        %v2197 = vpack.c.bf16 %v1238, %v1237
        %v2198 = vpack.c.bf16 %v2134, %v2133
        %v2199 = vpack.c.bf16 %v1240, %v1239
        %v2200 = vpack.c.bf16 %v2136, %v2135
        %v2201 = vpack.c.bf16 %v1242, %v1241
        %v2202 = vpack.c.bf16 %v2138, %v2137
        %v2203 = vpack.c.bf16 %v1244, %v1243
        %v2204 = vpack.c.bf16 %v2140, %v2139
        %v2205 = vpack.c.bf16 %v1246, %v1245
        %v2206 = vpack.c.bf16 %v2142, %v2141
        %v2207 = vpack.c.bf16 %v1248, %v1247
        %v2208 = vpack.c.bf16 %v2144, %v2143
        %v2209 = vpack.c.bf16 %v1250, %v1249
        %v2210 = vpack.c.bf16 %v2146, %v2145
        %v2211 = vpack.c.bf16 %v1252, %v1251
        %v2212 = vpack.c.bf16 %v2148, %v2147
        %v2213 = vpack.c.bf16 %v1254, %v1253
        %v2214 = vpack.c.bf16 %v2150, %v2149
        %v2215 = vpack.c.bf16 %v1256, %v1255
        %v2216 = vpack.c.bf16 %v2152, %v2151
        %v2217 = vpack.c.bf16 %v1258, %v1257
        %v2218 = vpack.c.bf16 %v2154, %v2153
        %v2219 = vpack.c.bf16 %v1260, %v1259
        %v2220 = vpack.c.bf16 %v2156, %v2155
        %v2221 = vpack.c.bf16 %v1262, %v1261
        %v2222 = vpack.c.bf16 %v2158, %v2157
        %v2223 = vld [vmem:[#allocation7] sm:$0xf]
        %v2224 = vld [vmem:[#allocation7 + $0x4] sm:$0xf]
        %v2225 = vld [vmem:[#allocation7 + $0x8] sm:$0xf]
        %v2226 = vld [vmem:[#allocation7 + $0xc] sm:$0xf]
        %v2227 = vld [vmem:[#allocation7 + $0x10] sm:$0xf]
        %v2228 = vld [vmem:[#allocation7 + $0x14] sm:$0xf]
        %v2229 = vld [vmem:[#allocation7 + $0x18] sm:$0xf]
        %v2230 = vld [vmem:[#allocation7 + $0x1c] sm:$0xf]
        %v2231 = vld [vmem:[#allocation7 + $0x20] sm:$0xf]
        %v2232 = vld [vmem:[#allocation7 + $0x24] sm:$0xf]
        %v2233 = vld [vmem:[#allocation7 + $0x28] sm:$0xf]
        %v2234 = vld [vmem:[#allocation7 + $0x2c] sm:$0xf]
        %v2235 = vld [vmem:[#allocation7 + $0x30] sm:$0xf]
        %v2236 = vld [vmem:[#allocation7 + $0x34] sm:$0xf]
        %v2237 = vld [vmem:[#allocation7 + $0x38] sm:$0xf]
        %v2238 = vld [vmem:[#allocation7 + $0x3c] sm:$0xf]
        %v2239 = vld [vmem:[#allocation7 + $0x40] sm:$0xf]
        %v2240 = vld [vmem:[#allocation7 + $0x44] sm:$0xf]
        %v2241 = vld [vmem:[#allocation7 + $0x48] sm:$0xf]
        %v2242 = vld [vmem:[#allocation7 + $0x4c] sm:$0xf]
        %v2243 = vld [vmem:[#allocation7 + $0x50] sm:$0xf]
        %v2244 = vld [vmem:[#allocation7 + $0x54] sm:$0xf]
        %v2245 = vld [vmem:[#allocation7 + $0x58] sm:$0xf]
        %v2246 = vld [vmem:[#allocation7 + $0x5c] sm:$0xf]
        %v2247 = vld [vmem:[#allocation7 + $0x60] sm:$0xf]
        %v2248 = vld [vmem:[#allocation7 + $0x64] sm:$0xf]
        %v2249 = vld [vmem:[#allocation7 + $0x68] sm:$0xf]
        %v2250 = vld [vmem:[#allocation7 + $0x6c] sm:$0xf]
        %v2251 = vld [vmem:[#allocation7 + $0x70] sm:$0xf]
        %v2252 = vld [vmem:[#allocation7 + $0x74] sm:$0xf]
        %v2253 = vld [vmem:[#allocation7 + $0x78] sm:$0xf]
        %v2254 = vld [vmem:[#allocation7 + $0x7c] sm:$0xf]
        %v2255 = vld [vmem:[%s5] sm:$0x1]
        %v2257 = vlaneseq
        %v2258 = vshrl.u32 %v2257, 7
        %v2259 = vsub.s32 0, %v2258
        %v2260 = vrot.slane %v2255, %v2259
        %v2294 = vunpack.c.l.b16 %v2223
        %v2295 = vunpack.c.l.b16 %v2224
        %v2296 = vunpack.c.l.b16 %v2225
        %v2297 = vunpack.c.l.b16 %v2226
        %v2298 = vunpack.c.l.b16 %v2227
        %v2299 = vunpack.c.l.b16 %v2228
        %v2300 = vunpack.c.l.b16 %v2229
        %v2301 = vunpack.c.l.b16 %v2230
        %v2302 = vunpack.c.l.b16 %v2231
        %v2303 = vunpack.c.l.b16 %v2232
        %v2304 = vunpack.c.l.b16 %v2233
        %v2305 = vunpack.c.l.b16 %v2234
        %v2306 = vunpack.c.l.b16 %v2235
        %v2307 = vunpack.c.l.b16 %v2236
        %v2308 = vunpack.c.l.b16 %v2237
        %v2309 = vunpack.c.l.b16 %v2238
        %v2310 = vunpack.c.l.b16 %v2239
        %v2311 = vunpack.c.l.b16 %v2240
        %v2312 = vunpack.c.l.b16 %v2241
        %v2313 = vunpack.c.l.b16 %v2242
        %v2314 = vunpack.c.l.b16 %v2243
        %v2315 = vunpack.c.l.b16 %v2244
        %v2316 = vunpack.c.l.b16 %v2245
        %v2317 = vunpack.c.l.b16 %v2246
        %v2318 = vunpack.c.l.b16 %v2247
        %v2319 = vunpack.c.l.b16 %v2248
        %v2320 = vunpack.c.l.b16 %v2249
        %v2321 = vunpack.c.l.b16 %v2250
        %v2322 = vunpack.c.l.b16 %v2251
        %v2323 = vunpack.c.l.b16 %v2252
        %v2324 = vunpack.c.l.b16 %v2253
        %v2325 = vunpack.c.l.b16 %v2254
        %v2326 = vpack.c.b16 %v2295, %v2294
        %v2327 = vpack.c.b16 %v2297, %v2296
        %v2328 = vpack.c.b16 %v2299, %v2298
        %v2329 = vpack.c.b16 %v2301, %v2300
        %v2330 = vpack.c.b16 %v2303, %v2302
        %v2331 = vpack.c.b16 %v2305, %v2304
        %v2332 = vpack.c.b16 %v2307, %v2306
        %v2333 = vpack.c.b16 %v2309, %v2308
        %v2334 = vpack.c.b16 %v2311, %v2310
        %v2335 = vpack.c.b16 %v2313, %v2312
        %v2336 = vpack.c.b16 %v2315, %v2314
        %v2337 = vpack.c.b16 %v2317, %v2316
        %v2338 = vpack.c.b16 %v2319, %v2318
        %v2339 = vpack.c.b16 %v2321, %v2320
        %v2340 = vpack.c.b16 %v2323, %v2322
        %v2341 = vpack.c.b16 %v2325, %v2324
        %2358 = vmatprep.subr.bf16.mxu0 0
        %2359 = vmatpush1.bf16.msra.mxu0 %v2333
        %2360 = vmatprep.subr.bf16.mxu0 0
        %2361 = vmatpush1.bf16.msra.mxu0 %v2332
        %2362 = vmatprep.subr.bf16.mxu0 0
        %2363 = vmatpush1.bf16.msra.mxu0 %v2331
        %2364 = vmatprep.subr.bf16.mxu0 0
        %2365 = vmatpush1.bf16.msra.mxu0 %v2330
        %2366 = vmatprep.subr.bf16.mxu0 0
        %2367 = vmatpush1.bf16.msra.mxu0 %v2329
        %2368 = vmatprep.subr.bf16.mxu0 0
        %2369 = vmatpush1.bf16.msra.mxu0 %v2328
        %2370 = vmatprep.subr.bf16.mxu0 0
        %2371 = vmatpush1.bf16.msra.mxu0 %v2327
        %2372 = vmatprep.subr.bf16.mxu0 0
        %2373 = vmatpush1.bf16.msra.mxu0 %v2326
        %2374 = vmatprep.subr.bf16.mxu0 0
        %2375 = vmatpush2.bf16.msra.mxu0 %v2341
        %2376 = vmatprep.subr.bf16.mxu0 0
        %2377 = vmatpush2.bf16.msra.mxu0 %v2340
        %2378 = vmatprep.subr.bf16.mxu0 0
        %2379 = vmatpush2.bf16.msra.mxu0 %v2339
        %2380 = vmatprep.subr.bf16.mxu0 0
        %2381 = vmatpush2.bf16.msra.mxu0 %v2338
        %2382 = vmatprep.subr.bf16.mxu0 0
        %2383 = vmatpush2.bf16.msra.mxu0 %v2337
        %2384 = vmatprep.subr.bf16.mxu0 0
        %2385 = vmatpush2.bf16.msra.mxu0 %v2336
        %2386 = vmatprep.subr.bf16.mxu0 0
        %2387 = vmatpush2.bf16.msra.mxu0 %v2335
        %2388 = vmatprep.subr.bf16.mxu0 0
        %2389 = vmatpush2.bf16.msra.mxu0 %v2334
        %2390 = vmatprep.mubr.bf16.mxu0 %v2160
        %2391 = vmatmul.mubr.bf16.gmra.mxu0 %v2159
        %v2392 = vpop.f32.mrf.mxu0
        %v2393 = vadd.f32 %v2260, %v2392
        %v2394 = vpop.f32.mrf.mxu0
        %v2395 = vpop.f32.mrf.mxu0
        %v2396 = vadd.f32 %v2260, %v2395
        %v2397 = vpop.f32.mrf.mxu0
        %2398 = vmatprep.mubr.bf16.mxu0 %v2162
        %2399 = vmatmul.mubr.bf16.gmra.mxu0 %v2161
        %v2400 = vpop.f32.mrf.mxu0
        %v2401 = vadd.f32 %v2260, %v2400
        %v2402 = vpop.f32.mrf.mxu0
        %v2403 = vpop.f32.mrf.mxu0
        %v2404 = vadd.f32 %v2260, %v2403
        %v2405 = vpop.f32.mrf.mxu0
        %2406 = vmatprep.mubr.bf16.mxu0 %v2164
        %2407 = vmatmul.mubr.bf16.gmra.mxu0 %v2163
        %v2408 = vpop.f32.mrf.mxu0
        %v2409 = vadd.f32 %v2260, %v2408
        %v2410 = vpop.f32.mrf.mxu0
        %v2411 = vpop.f32.mrf.mxu0
        %v2412 = vadd.f32 %v2260, %v2411
        %v2413 = vpop.f32.mrf.mxu0
        %2414 = vmatprep.mubr.bf16.mxu0 %v2166
        %2415 = vmatmul.mubr.bf16.gmra.mxu0 %v2165
        %v2416 = vpop.f32.mrf.mxu0
        %v2417 = vadd.f32 %v2260, %v2416
        %v2418 = vpop.f32.mrf.mxu0
        %v2419 = vpop.f32.mrf.mxu0
        %v2420 = vadd.f32 %v2260, %v2419
        %v2421 = vpop.f32.mrf.mxu0
        %2422 = vmatprep.mubr.bf16.mxu0 %v2168
        %2423 = vmatmul.mubr.bf16.gmra.mxu0 %v2167
        %v2424 = vpop.f32.mrf.mxu0
        %v2425 = vadd.f32 %v2260, %v2424
        %v2426 = vpop.f32.mrf.mxu0
        %v2427 = vpop.f32.mrf.mxu0
        %v2428 = vadd.f32 %v2260, %v2427
        %v2429 = vpop.f32.mrf.mxu0
        %2430 = vmatprep.mubr.bf16.mxu0 %v2170
        %2431 = vmatmul.mubr.bf16.gmra.mxu0 %v2169
        %v2432 = vpop.f32.mrf.mxu0
        %v2433 = vadd.f32 %v2260, %v2432
        %v2434 = vpop.f32.mrf.mxu0
        %v2435 = vpop.f32.mrf.mxu0
        %v2436 = vadd.f32 %v2260, %v2435
        %v2437 = vpop.f32.mrf.mxu0
        %2438 = vmatprep.mubr.bf16.mxu0 %v2172
        %2439 = vmatmul.mubr.bf16.gmra.mxu0 %v2171
        %v2440 = vpop.f32.mrf.mxu0
        %v2441 = vadd.f32 %v2260, %v2440
        %v2442 = vpop.f32.mrf.mxu0
        %v2443 = vpop.f32.mrf.mxu0
        %v2444 = vadd.f32 %v2260, %v2443
        %v2445 = vpop.f32.mrf.mxu0
        %2446 = vmatprep.mubr.bf16.mxu0 %v2174
        %2447 = vmatmul.mubr.bf16.gmra.mxu0 %v2173
        %v2448 = vpop.f32.mrf.mxu0
        %v2449 = vadd.f32 %v2260, %v2448
        %v2450 = vpop.f32.mrf.mxu0
        %v2451 = vpop.f32.mrf.mxu0
        %v2452 = vadd.f32 %v2260, %v2451
        %v2453 = vpop.f32.mrf.mxu0
        %2454 = vmatprep.mubr.bf16.mxu0 %v2176
        %2455 = vmatmul.mubr.bf16.gmra.mxu0 %v2175
        %v2456 = vpop.f32.mrf.mxu0
        %v2457 = vadd.f32 %v2260, %v2456
        %v2458 = vpop.f32.mrf.mxu0
        %v2459 = vpop.f32.mrf.mxu0
        %v2460 = vadd.f32 %v2260, %v2459
        %v2461 = vpop.f32.mrf.mxu0
        %2462 = vmatprep.mubr.bf16.mxu0 %v2178
        %2463 = vmatmul.mubr.bf16.gmra.mxu0 %v2177
        %v2464 = vpop.f32.mrf.mxu0
        %v2465 = vadd.f32 %v2260, %v2464
        %v2466 = vpop.f32.mrf.mxu0
        %v2467 = vpop.f32.mrf.mxu0
        %v2468 = vadd.f32 %v2260, %v2467
        %v2469 = vpop.f32.mrf.mxu0
        %2470 = vmatprep.mubr.bf16.mxu0 %v2180
        %2471 = vmatmul.mubr.bf16.gmra.mxu0 %v2179
        %v2472 = vpop.f32.mrf.mxu0
        %v2473 = vadd.f32 %v2260, %v2472
        %v2474 = vpop.f32.mrf.mxu0
        %v2475 = vpop.f32.mrf.mxu0
        %v2476 = vadd.f32 %v2260, %v2475
        %v2477 = vpop.f32.mrf.mxu0
        %2478 = vmatprep.mubr.bf16.mxu0 %v2182
        %2479 = vmatmul.mubr.bf16.gmra.mxu0 %v2181
        %v2480 = vpop.f32.mrf.mxu0
        %v2481 = vadd.f32 %v2260, %v2480
        %v2482 = vpop.f32.mrf.mxu0
        %v2483 = vpop.f32.mrf.mxu0
        %v2484 = vadd.f32 %v2260, %v2483
        %v2485 = vpop.f32.mrf.mxu0
        %2486 = vmatprep.mubr.bf16.mxu0 %v2184
        %2487 = vmatmul.mubr.bf16.gmra.mxu0 %v2183
        %v2488 = vpop.f32.mrf.mxu0
        %v2489 = vadd.f32 %v2260, %v2488
        %v2490 = vpop.f32.mrf.mxu0
        %v2491 = vpop.f32.mrf.mxu0
        %v2492 = vadd.f32 %v2260, %v2491
        %v2493 = vpop.f32.mrf.mxu0
        %2494 = vmatprep.mubr.bf16.mxu0 %v2186
        %2495 = vmatmul.mubr.bf16.gmra.mxu0 %v2185
        %v2496 = vpop.f32.mrf.mxu0
        %v2497 = vadd.f32 %v2260, %v2496
        %v2498 = vpop.f32.mrf.mxu0
        %v2499 = vpop.f32.mrf.mxu0
        %v2500 = vadd.f32 %v2260, %v2499
        %v2501 = vpop.f32.mrf.mxu0
        %2502 = vmatprep.mubr.bf16.mxu0 %v2188
        %2503 = vmatmul.mubr.bf16.gmra.mxu0 %v2187
        %v2504 = vpop.f32.mrf.mxu0
        %v2505 = vadd.f32 %v2260, %v2504
        %v2506 = vpop.f32.mrf.mxu0
        %v2507 = vpop.f32.mrf.mxu0
        %v2508 = vadd.f32 %v2260, %v2507
        %v2509 = vpop.f32.mrf.mxu0
        %2510 = vmatprep.mubr.bf16.mxu0 %v2190
        %2511 = vmatmul.mubr.bf16.gmra.mxu0 %v2189
        %v2512 = vpop.f32.mrf.mxu0
        %v2513 = vadd.f32 %v2260, %v2512
        %v2514 = vpop.f32.mrf.mxu0
        %v2515 = vpop.f32.mrf.mxu0
        %v2516 = vadd.f32 %v2260, %v2515
        %v2517 = vpop.f32.mrf.mxu0
        %2518 = vmatprep.mubr.bf16.mxu0 %v2192
        %2519 = vmatmul.mubr.bf16.gmra.mxu0 %v2191
        %v2520 = vpop.f32.mrf.mxu0
        %v2521 = vadd.f32 %v2260, %v2520
        %v2522 = vpop.f32.mrf.mxu0
        %v2523 = vpop.f32.mrf.mxu0
        %v2524 = vadd.f32 %v2260, %v2523
        %v2525 = vpop.f32.mrf.mxu0
        %2526 = vmatprep.mubr.bf16.mxu0 %v2194
        %2527 = vmatmul.mubr.bf16.gmra.mxu0 %v2193
        %v2528 = vpop.f32.mrf.mxu0
        %v2529 = vadd.f32 %v2260, %v2528
        %v2530 = vpop.f32.mrf.mxu0
        %v2531 = vpop.f32.mrf.mxu0
        %v2532 = vadd.f32 %v2260, %v2531
        %v2533 = vpop.f32.mrf.mxu0
        %2534 = vmatprep.mubr.bf16.mxu0 %v2196
        %2535 = vmatmul.mubr.bf16.gmra.mxu0 %v2195
        %v2536 = vpop.f32.mrf.mxu0
        %v2537 = vadd.f32 %v2260, %v2536
        %v2538 = vpop.f32.mrf.mxu0
        %v2539 = vpop.f32.mrf.mxu0
        %v2540 = vadd.f32 %v2260, %v2539
        %v2541 = vpop.f32.mrf.mxu0
        %2542 = vmatprep.mubr.bf16.mxu0 %v2198
        %2543 = vmatmul.mubr.bf16.gmra.mxu0 %v2197
        %v2544 = vpop.f32.mrf.mxu0
        %v2545 = vadd.f32 %v2260, %v2544
        %v2546 = vpop.f32.mrf.mxu0
        %v2547 = vpop.f32.mrf.mxu0
        %v2548 = vadd.f32 %v2260, %v2547
        %v2549 = vpop.f32.mrf.mxu0
        %2550 = vmatprep.mubr.bf16.mxu0 %v2200
        %2551 = vmatmul.mubr.bf16.gmra.mxu0 %v2199
        %v2552 = vpop.f32.mrf.mxu0
        %v2553 = vadd.f32 %v2260, %v2552
        %v2554 = vpop.f32.mrf.mxu0
        %v2555 = vpop.f32.mrf.mxu0
        %v2556 = vadd.f32 %v2260, %v2555
        %v2557 = vpop.f32.mrf.mxu0
        %2558 = vmatprep.mubr.bf16.mxu0 %v2202
        %2559 = vmatmul.mubr.bf16.gmra.mxu0 %v2201
        %v2560 = vpop.f32.mrf.mxu0
        %v2561 = vadd.f32 %v2260, %v2560
        %v2562 = vpop.f32.mrf.mxu0
        %v2563 = vpop.f32.mrf.mxu0
        %v2564 = vadd.f32 %v2260, %v2563
        %v2565 = vpop.f32.mrf.mxu0
        %2566 = vmatprep.mubr.bf16.mxu0 %v2204
        %2567 = vmatmul.mubr.bf16.gmra.mxu0 %v2203
        %v2568 = vpop.f32.mrf.mxu0
        %v2569 = vadd.f32 %v2260, %v2568
        %v2570 = vpop.f32.mrf.mxu0
        %v2571 = vpop.f32.mrf.mxu0
        %v2572 = vadd.f32 %v2260, %v2571
        %v2573 = vpop.f32.mrf.mxu0
        %2574 = vmatprep.mubr.bf16.mxu0 %v2206
        %2575 = vmatmul.mubr.bf16.gmra.mxu0 %v2205
        %v2576 = vpop.f32.mrf.mxu0
        %v2577 = vadd.f32 %v2260, %v2576
        %v2578 = vpop.f32.mrf.mxu0
        %v2579 = vpop.f32.mrf.mxu0
        %v2580 = vadd.f32 %v2260, %v2579
        %v2581 = vpop.f32.mrf.mxu0
        %2582 = vmatprep.mubr.bf16.mxu0 %v2208
        %2583 = vmatmul.mubr.bf16.gmra.mxu0 %v2207
        %v2584 = vpop.f32.mrf.mxu0
        %v2585 = vadd.f32 %v2260, %v2584
        %v2586 = vpop.f32.mrf.mxu0
        %v2587 = vpop.f32.mrf.mxu0
        %v2588 = vadd.f32 %v2260, %v2587
        %v2589 = vpop.f32.mrf.mxu0
        %2590 = vmatprep.mubr.bf16.mxu0 %v2210
        %2591 = vmatmul.mubr.bf16.gmra.mxu0 %v2209
        %v2592 = vpop.f32.mrf.mxu0
        %v2593 = vadd.f32 %v2260, %v2592
        %v2594 = vpop.f32.mrf.mxu0
        %v2595 = vpop.f32.mrf.mxu0
        %v2596 = vadd.f32 %v2260, %v2595
        %v2597 = vpop.f32.mrf.mxu0
        %2598 = vmatprep.mubr.bf16.mxu0 %v2212
        %2599 = vmatmul.mubr.bf16.gmra.mxu0 %v2211
        %v2600 = vpop.f32.mrf.mxu0
        %v2601 = vadd.f32 %v2260, %v2600
        %v2602 = vpop.f32.mrf.mxu0
        %v2603 = vpop.f32.mrf.mxu0
        %v2604 = vadd.f32 %v2260, %v2603
        %v2605 = vpop.f32.mrf.mxu0
        %2606 = vmatprep.mubr.bf16.mxu0 %v2214
        %2607 = vmatmul.mubr.bf16.gmra.mxu0 %v2213
        %v2608 = vpop.f32.mrf.mxu0
        %v2609 = vadd.f32 %v2260, %v2608
        %v2610 = vpop.f32.mrf.mxu0
        %v2611 = vpop.f32.mrf.mxu0
        %v2612 = vadd.f32 %v2260, %v2611
        %v2613 = vpop.f32.mrf.mxu0
        %2614 = vmatprep.mubr.bf16.mxu0 %v2216
        %2615 = vmatmul.mubr.bf16.gmra.mxu0 %v2215
        %v2616 = vpop.f32.mrf.mxu0
        %v2617 = vadd.f32 %v2260, %v2616
        %v2618 = vpop.f32.mrf.mxu0
        %v2619 = vpop.f32.mrf.mxu0
        %v2620 = vadd.f32 %v2260, %v2619
        %v2621 = vpop.f32.mrf.mxu0
        %2622 = vmatprep.mubr.bf16.mxu0 %v2218
        %2623 = vmatmul.mubr.bf16.gmra.mxu0 %v2217
        %v2624 = vpop.f32.mrf.mxu0
        %v2625 = vadd.f32 %v2260, %v2624
        %v2626 = vpop.f32.mrf.mxu0
        %v2627 = vpop.f32.mrf.mxu0
        %v2628 = vadd.f32 %v2260, %v2627
        %v2629 = vpop.f32.mrf.mxu0
        %2630 = vmatprep.mubr.bf16.mxu0 %v2220
        %2631 = vmatmul.mubr.bf16.gmra.mxu0 %v2219
        %v2632 = vpop.f32.mrf.mxu0
        %v2633 = vadd.f32 %v2260, %v2632
        %v2634 = vpop.f32.mrf.mxu0
        %v2635 = vpop.f32.mrf.mxu0
        %v2636 = vadd.f32 %v2260, %v2635
        %v2637 = vpop.f32.mrf.mxu0
        %2638 = vmatprep.mubr.bf16.mxu0 %v2222
        %2639 = vmatmul.mubr.bf16.gmra.mxu0 %v2221
        %v2640 = vpop.f32.mrf.mxu0
        %v2641 = vadd.f32 %v2260, %v2640
        %v2642 = vpop.f32.mrf.mxu0
        %v2643 = vpop.f32.mrf.mxu0
        %v2644 = vadd.f32 %v2260, %v2643
        %v2645 = vpop.f32.mrf.mxu0
        %2646 = vdwg.mxu0
        %2647 = vst [vmem:[%s335] sm:$0xff] %v2393
        %2648 = vst [vmem:[%s335 + $0x8] sm:$0xff] %v2396
        %2649 = vst [vmem:[%s335 + $0x10] sm:$0xff] %v2401
        %2650 = vst [vmem:[%s335 + $0x18] sm:$0xff] %v2404
        %2651 = vst [vmem:[%s335 + $0x20] sm:$0xff] %v2409
        %2652 = vst [vmem:[%s335 + $0x28] sm:$0xff] %v2412
        %2653 = vst [vmem:[%s335 + $0x30] sm:$0xff] %v2417
        %2654 = vst [vmem:[%s335 + $0x38] sm:$0xff] %v2420
        %2655 = vst [vmem:[%s335 + $0x40] sm:$0xff] %v2425
        %2656 = vst [vmem:[%s335 + $0x48] sm:$0xff] %v2428
        %2657 = vst [vmem:[%s335 + $0x50] sm:$0xff] %v2433
        %2658 = vst [vmem:[%s335 + $0x58] sm:$0xff] %v2436
        %2659 = vst [vmem:[%s335 + $0x60] sm:$0xff] %v2441
        %2660 = vst [vmem:[%s335 + $0x68] sm:$0xff] %v2444
        %2661 = vst [vmem:[%s335 + $0x70] sm:$0xff] %v2449
        %2662 = vst [vmem:[%s335 + $0x78] sm:$0xff] %v2452
        %2663 = vst [vmem:[%s335 + $0x80] sm:$0xff] %v2457
        %2664 = vst [vmem:[%s335 + $0x88] sm:$0xff] %v2460
        %2665 = vst [vmem:[%s335 + $0x90] sm:$0xff] %v2465
        %2666 = vst [vmem:[%s335 + $0x98] sm:$0xff] %v2468
        %2667 = vst [vmem:[%s335 + $0xa0] sm:$0xff] %v2473
        %2668 = vst [vmem:[%s335 + $0xa8] sm:$0xff] %v2476
        %2669 = vst [vmem:[%s335 + $0xb0] sm:$0xff] %v2481
        %2670 = vst [vmem:[%s335 + $0xb8] sm:$0xff] %v2484
        %2671 = vst [vmem:[%s335 + $0xc0] sm:$0xff] %v2489
        %2672 = vst [vmem:[%s335 + $0xc8] sm:$0xff] %v2492
        %2673 = vst [vmem:[%s335 + $0xd0] sm:$0xff] %v2497
        %2674 = vst [vmem:[%s335 + $0xd8] sm:$0xff] %v2500
        %2675 = vst [vmem:[%s335 + $0xe0] sm:$0xff] %v2505
        %2676 = vst [vmem:[%s335 + $0xe8] sm:$0xff] %v2508
        %2677 = vst [vmem:[%s335 + $0xf0] sm:$0xff] %v2513
        %2678 = vst [vmem:[%s335 + $0xf8] sm:$0xff] %v2516
        %2679 = vst [vmem:[%s335 + $0x100] sm:$0xff] %v2521
        %2680 = vst [vmem:[%s335 + $0x108] sm:$0xff] %v2524
        %2681 = vst [vmem:[%s335 + $0x110] sm:$0xff] %v2529
        %2682 = vst [vmem:[%s335 + $0x118] sm:$0xff] %v2532
        %2683 = vst [vmem:[%s335 + $0x120] sm:$0xff] %v2537
        %2684 = vst [vmem:[%s335 + $0x128] sm:$0xff] %v2540
        %2685 = vst [vmem:[%s335 + $0x130] sm:$0xff] %v2545
        %2686 = vst [vmem:[%s335 + $0x138] sm:$0xff] %v2548
        %2687 = vst [vmem:[%s335 + $0x140] sm:$0xff] %v2553
        %2688 = vst [vmem:[%s335 + $0x148] sm:$0xff] %v2556
        %2689 = vst [vmem:[%s335 + $0x150] sm:$0xff] %v2561
        %2690 = vst [vmem:[%s335 + $0x158] sm:$0xff] %v2564
        %2691 = vst [vmem:[%s335 + $0x160] sm:$0xff] %v2569
        %2692 = vst [vmem:[%s335 + $0x168] sm:$0xff] %v2572
        %2693 = vst [vmem:[%s335 + $0x170] sm:$0xff] %v2577
        %2694 = vst [vmem:[%s335 + $0x178] sm:$0xff] %v2580
        %2695 = vst [vmem:[%s335 + $0x180] sm:$0xff] %v2585
        %2696 = vst [vmem:[%s335 + $0x188] sm:$0xff] %v2588
        %2697 = vst [vmem:[%s335 + $0x190] sm:$0xff] %v2593
        %2698 = vst [vmem:[%s335 + $0x198] sm:$0xff] %v2596
        %2699 = vst [vmem:[%s335 + $0x1a0] sm:$0xff] %v2601
        %2700 = vst [vmem:[%s335 + $0x1a8] sm:$0xff] %v2604
        %2701 = vst [vmem:[%s335 + $0x1b0] sm:$0xff] %v2609
        %2702 = vst [vmem:[%s335 + $0x1b8] sm:$0xff] %v2612
        %2703 = vst [vmem:[%s335 + $0x1c0] sm:$0xff] %v2617
        %2704 = vst [vmem:[%s335 + $0x1c8] sm:$0xff] %v2620
        %2705 = vst [vmem:[%s335 + $0x1d0] sm:$0xff] %v2625
        %2706 = vst [vmem:[%s335 + $0x1d8] sm:$0xff] %v2628
        %2707 = vst [vmem:[%s335 + $0x1e0] sm:$0xff] %v2633
        %2708 = vst [vmem:[%s335 + $0x1e8] sm:$0xff] %v2636
        %2709 = vst [vmem:[%s335 + $0x1f0] sm:$0xff] %v2641
        %2710 = vst [vmem:[%s335 + $0x1f8] sm:$0xff] %v2644
        %s2711 = sand.u32 %s170, 1
        %s2712 = scalar_lea.sflag [#allocation4], %s2711
        %s2713 = sand.u32 %s170, 1
        %s2714 = smul.addr %s2713, 512
        %s2715 = scalar_lea.vmem [#allocation8], %s2714
        // Predicated region
        $region57: #{tpu_custom_call.1} parent=43 // pred_check
          %p2716 = pneg %p180
        $region58: #{tpu_custom_call.1} parent=43 // pred_check_branch
          %2718 = sbr.rel (%p2716) target = $region60
        $region59: #{tpu_custom_call.1} parent=43 // pred_region
          %s2719 = smul.u32 64, %s26
          %s2720 = ssub.s32 150, %s2719
          %p2721 = scmp.lt.s32.totalorder %s2720, 64
          %s2722 = scalar_select %p2721, %s2720, 64
          %s2723 = smul.u32 128, %s2722
          %s2725 = ssub.s32 8192, %s2723
          %2726 = vsyncadd %s2712, %s2725
          %p2727 = scmp.ne.s32.totalorder 0, %s2723
          %s2728 = smul.addr %s2719, 128
          %s2729 = scalar_lea.hbm %s6, %s2728
          %s2730 = smul.u32 8, %s2722
          %s2731 = sshll.u32 %s2715, 4
          %s2732 = int_to_ptr.vmem [resolvable:$true] %s2731
          %s2733 = sshll.u32 %s2730, 4
          %2737 = dma.vmem_to_hbm [thread:$0]  (%p2727), %s2732, %s2733, %s2729, %s2712, 128, 128, 8
        $region60: #{tpu_custom_call.1} parent=43 // pred_fallthru
          _
      $region44: #{tpu_custom_call.1} parent=5 // pred_fallthru
        _
      %p2738 = scmp.le.s32.totalorder 2, %s21
      // Predicated region
      $region61: #{tpu_custom_call.1} parent=5 // pred_check
        %p2739 = pneg %p2738
      $region62: #{tpu_custom_call.1} parent=5 // pred_check_branch
        %2741 = sbr.rel (%p2739) target = $region64
      $region63: #{tpu_custom_call.1} parent=5 // pred_region
        %s2742 = ssub.s32 %s21, 2
        // Predicated region
        $region65: #{tpu_custom_call.1} parent=63 // pred_check
          %p2743 = pneg %p186
        $region66: #{tpu_custom_call.1} parent=63 // pred_check_branch
          %2745 = sbr.rel (%p2743) target = $region68
        $region67: #{tpu_custom_call.1} parent=63 // pred_region
          %s2746 = sand.u32 %s171, 1
          %s2747 = scalar_lea.sflag [#allocation4], %s2746
          %s2748 = sand.u32 %s171, 1
          %s2749 = smul.addr %s2748, 512
          %s2750 = scalar_lea.vmem [#allocation8], %s2749
          %2751 = dma.done %s2747, 8192
        $region68: #{tpu_custom_call.1} parent=63 // pred_fallthru
          _
      $region64: #{tpu_custom_call.1} parent=5 // pred_fallthru
        _
    $region6: #{tpu_custom_call.1} parent=1 // loop_footer
      %s25 = sadd.s32 1, %s21
    $region7: #{tpu_custom_call.1} parent=1 // loop_footer_branch
      %20 = sbr.rel target = $region3
    $region8: #{tpu_custom_call.1} parent=1 // loop_exit
      _
    %2752 = vsyncpa [#allocation3], 1
    %s2753 = scalar_lea.sflag [#allocation3], 1
    %2754 = vsyncpa %s2753, 1
    %2755 = vsyncpa [#allocation6], 1
    %s2756 = scalar_lea.sflag [#allocation6], 1
    %2757 = vsyncpa %s2756, 1
    %2758 = vsyncpa [#allocation4], 1
    %s2759 = scalar_lea.sflag [#allocation4], 1
    %2760 = vsyncpa %s2759, 1

</llo_original>
